<compile_context>
chip_gen: v6e
topology: v6e:2x2x1
jax: 0.10.0
libtpu: 0.0.40
codegen_flags: <defaults>
</compile_context>

<pallas_src>
import jax
import jax.numpy as jnp
import numpy as np
from jax.experimental import pallas as pl
from jax.experimental.pallas import tpu as pltpu

# mirrors the torch-global `batch_size` (small stand-in for the test)
batch_size = 4


def pointer_kernel(h_ref, u_ref, v_ref, w1_ref, w2_ref, b_ref, out_ref):
    # h_ref: (B*lp, in1)   u_ref: (B*lq, in2)   v_ref: (B, H)
    # w1_ref: (in2+in1+H, H) = [Wu^T ; Wh^T ; Wha^T]
    # w2_ref: (in1+H, 3H)    = [W_ih^T ; W_hh^T]      (gate order r, z, n)
    # b_ref : (3, 3H)        = [[Wu.b, 0, 0] ; b_ih ; b_hh]
    # out_ref: (B, 2*lp)     = [p1 | p2]
    h2 = h_ref[...]
    u2 = u_ref[...]
    v2 = v_ref[...]
    B, H = v2.shape
    in1 = h2.shape[1]
    in2 = u2.shape[1]
    lp = h2.shape[0] // B
    lq = u2.shape[0] // B

    # static slices of the packed parameter slabs
    w1 = w1_ref[...]
    wu_wT = w1[0:in2, :]                       # (in2, H)
    wh_wT = w1[in2:in2 + in1, :]               # (in1, H)
    wha_wT = w1[in2 + in1:in2 + in1 + H, :]    # (H, H)
    w2w = w2_ref[...]
    w_ihT = w2w[0:in1, :]                      # (in1, 3H)
    w_hhT = w2w[in1:in1 + H, :]                # (H, 3H)
    wu_b = b_ref[0:1, 0:H]                     # (1, H)
    b_i = b_ref[1:2, :]                        # (1, 3H)
    b_h = b_ref[2:3, :]                        # (1, 3H)

    # hoisted v broadcast, reused by all three score computations
    v_b = v2[:, None, :]                       # (B, 1, H)

    def softmax_rows(s):
        # softmax along the last (lane) axis of a (B, n) slab
        m = jnp.max(s, axis=-1, keepdims=True)
        e = jnp.exp(s - m)
        denom = jnp.sum(e, axis=-1, keepdims=True)
        return e * pl.reciprocal(denom, approx=True)

    # ---- attention over u -> context r ----------------------------------
    xu = jnp.tanh(jnp.dot(u2, wu_wT, preferred_element_type=jnp.float32)
                  + wu_b)                                      # (B*lq, H)
    s1 = jnp.sum(xu.reshape(B, lq, H) * v_b, axis=2)           # (B, lq)
    a1 = softmax_rows(s1)                                      # (B, lq)
    u3 = u2.reshape(B, lq, in2)
    r = jnp.sum(a1[:, :, None] * u3, axis=1)                   # (B, in2)  VPU

    # ---- Wh . h (shared across both pointer steps) -----------------------
    wh_h = jnp.dot(h2, wh_wT,
                   preferred_element_type=jnp.float32).reshape(B, lp, H)
    h3 = h2.reshape(B, lp, in1)

    def pointer_probs(r_vec):                                  # (B, H) -> (B, lp)
        wha_r = jnp.dot(r_vec, wha_wT, preferred_element_type=jnp.float32)
        x = jnp.tanh(wh_h + wha_r[:, None, :])                 # (B, lp, H)
        s = jnp.sum(x * v_b, axis=2)                           # (B, lp)
        return softmax_rows(s)

    # ---- first pointer distribution --------------------------------------
    p1 = pointer_probs(r)                                      # (B, lp)
    c = jnp.sum(p1[:, :, None] * h3, axis=1)                   # (B, in1)  VPU

    # ---- GRUCell update (fused gates, PyTorch order r, z, n) --------------
    gi = jnp.dot(c, w_ihT, preferred_element_type=jnp.float32) + b_i  # (B, 3H)
    gh = jnp.dot(r, w_hhT, preferred_element_type=jnp.float32) + b_h  # (B, 3H)
    rg = jax.nn.sigmoid(gi[:, 0:H] + gh[:, 0:H])
    zg = jax.nn.sigmoid(gi[:, H:2 * H] + gh[:, H:2 * H])
    ng = jnp.tanh(gi[:, 2 * H:3 * H] + rg * gh[:, 2 * H:3 * H])
    r2 = (1.0 - zg) * ng + zg * r                              # (B, H)

    # ---- second pointer distribution --------------------------------------
    p2 = pointer_probs(r2)

    # single lane-dense store; wrapper splits back into (p1, p2)
    out_ref[...] = jnp.concatenate([p1, p2], axis=1)


def init_params(key, in_size1, in_size2):
    """Deterministic init matching the torch module's parameter shapes."""
    H = in_size2
    ks = jax.random.split(key, 8)

    def u_(k, shape, fan_in):
        bound = 1.0 / np.sqrt(fan_in)
        return jax.random.uniform(k, shape, jnp.float32, -bound, bound)

    return {
        "wu_w": u_(ks[0], (H, in_size2), in_size2),        # Wu.weight
        "wu_b": u_(ks[1], (H,), in_size2),                 # Wu.bias
        "wh_w": u_(ks[2], (H, in_size1), in_size1),        # Wh.weight (no bias)
        "wha_w": u_(ks[3], (H, in_size2), in_size2),       # Wha.weight (no bias)
        "gru_w_ih": u_(ks[4], (3 * H, in_size1), H),       # GRUCell.weight_ih
        "gru_w_hh": u_(ks[5], (3 * H, H), H),              # GRUCell.weight_hh
        "gru_b_ih": u_(ks[6], (3 * H,), H),                # GRUCell.bias_ih
        "gru_b_hh": u_(ks[7], (3 * H,), H),                # GRUCell.bias_hh
    }


def pointer_forward(h, u, v, params):
    lp, B, in1 = h.shape
    lq, _, in2 = u.shape
    H = in2

    # --- wrapper-side layout plumbing (free relative to in-kernel copies) ---
    # batch-first transpose + batch flatten -> sublane-dense 2-D MXU operands
    h_flat = jnp.transpose(h, (1, 0, 2)).reshape(B * lp, in1).astype(jnp.float32)
    u_flat = jnp.transpose(u, (1, 0, 2)).reshape(B * lq, in2).astype(jnp.float32)
    v2 = v.astype(jnp.float32)                               # (B, H)

    # pack 8 tiny parameter tensors into 3 slabs (fewer DMAs, less padding)
    w1 = jnp.concatenate([params["wu_w"].T,                  # (in2, H)
                          params["wh_w"].T,                  # (in1, H)
                          params["wha_w"].T],                # (H, H)
                         axis=0).astype(jnp.float32)         # (in2+in1+H, H)
    w2 = jnp.concatenate([params["gru_w_ih"].T,              # (in1, 3H)
                          params["gru_w_hh"].T],             # (H, 3H)
                         axis=0).astype(jnp.float32)         # (in1+H, 3H)
    wu_b_row = jnp.concatenate([params["wu_b"],
                                jnp.zeros((2 * H,), jnp.float32)])   # (3H,)
    b_slab = jnp.stack([wu_b_row,
                        params["gru_b_ih"],
                        params["gru_b_hh"]], axis=0).astype(jnp.float32)  # (3, 3H)

    inputs = (h_flat, u_flat, v2, w1, w2, b_slab)

    # advisory cost hint: keeps XLA from serializing around an assumed-big call
    flops = 2 * (B * lq * in2 * H + B * lp * in1 * H + 2 * B * H * H
                 + B * in1 * 3 * H + B * H * 3 * H
                 + B * lq * in2 + B * lp * in1 + B * lq * H + 2 * B * lp * H)
    transcendentals = B * (lq * H + 2 * lp * H + lq + 2 * lp + 3 * H + 3)
    bytes_accessed = int(sum(int(np.prod(x.shape)) * 4 for x in inputs)
                         + 2 * B * lp * 4)

    vmem_spec = pl.BlockSpec(memory_space=pltpu.MemorySpace.VMEM)

    out = pl.pallas_call(
        pointer_kernel,
        out_shape=jax.ShapeDtypeStruct((B, 2 * lp), jnp.float32),
        in_specs=[vmem_spec] * len(inputs),
        out_specs=vmem_spec,
        cost_estimate=pl.CostEstimate(flops=int(flops),
                                      transcendentals=int(transcendentals),
                                      bytes_accessed=bytes_accessed),
    )(*inputs)

    return out[:, :lp], out[:, lp:]   # p1, p2 : (B, lp) each


def pointer_reference(h, u, v, params):
    """Pure-JAX replica of the torch forward (for verification)."""
    lp, B, in1 = h.shape
    lq, _, in2 = u.shape
    H = in2
    u_ = jnp.transpose(u, (1, 0, 2))
    h_ = jnp.transpose(h, (1, 0, 2))

    x = jnp.tanh(jnp.einsum('lbd,hd->lbh', u, params["wu_w"]) + params["wu_b"])
    x = jnp.transpose(x, (1, 0, 2))
    s = jnp.einsum('blh,bh->bl', x, v)
    a = jax.nn.softmax(s, axis=1)
    r = jnp.einsum('bl,bld->bd', a, u_)

    def probs(rv):
        xx = jnp.tanh(jnp.einsum('lbd,hd->lbh', h, params["wh_w"])
                      + jnp.einsum('bd,hd->bh', rv, params["wha_w"])[None])
        xx = jnp.transpose(xx, (1, 0, 2))
        ss = jnp.einsum('blh,bh->bl', xx, v)
        return jax.nn.softmax(ss, axis=1)

    p1 = probs(r)
    c = jnp.einsum('bl,bld->bd', p1, h_)
    gi = c @ params["gru_w_ih"].T + params["gru_b_ih"]
    gh = r @ params["gru_w_hh"].T + params["gru_b_hh"]
    rg = jax.nn.sigmoid(gi[:, :H] + gh[:, :H])
    zg = jax.nn.sigmoid(gi[:, H:2 * H] + gh[:, H:2 * H])
    ng = jnp.tanh(gi[:, 2 * H:] + rg * gh[:, 2 * H:])
    r2 = (1.0 - zg) * ng + zg * r
    p2 = probs(r2)
    return p1, p2


if __name__ == "__main__":
    in_size1, in_size2 = 16, 32        # Pointer(in_size1, in_size2); hidden = in_size2
    lp, lq = 8, 6                      # sequence lengths of h and u
    B = batch_size

    key = jax.random.PRNGKey(0)
    k_h, k_u, k_v, k_p = jax.random.split(key, 4)
    h = jax.random.normal(k_h, (lp, B, in_size1), jnp.float32)
    u = jax.random.normal(k_u, (lq, B, in_size2), jnp.float32)
    v = jax.random.normal(k_v, (B, in_size2), jnp.float32)   # torch: randn(batch, H, 1)
    params = init_params(k_p, in_size1, in_size2)

    p1, p2 = pointer_forward(h, u, v, params)
    jax.block_until_ready((p1, p2))

    r1, r2 = pointer_reference(h, u, v, params)
    assert p1.shape == (B, lp) and p2.shape == (B, lp)
    assert np.allclose(np.asarray(p1), np.asarray(r1), rtol=5e-3, atol=5e-3)
    assert np.allclose(np.asarray(p2), np.asarray(r2), rtol=5e-3, atol=5e-3)

    print("KERNEL_OK")
</pallas_src>

<mosaic_0001>
module attributes {stable_mosaic.version = 11 : i64} {
  func.func @pointer_kernel(%arg0: memref<32x16xf32, #tpu.memory_space<vmem>>, %arg1: memref<24x32xf32, #tpu.memory_space<vmem>>, %arg2: memref<4x32xf32, #tpu.memory_space<vmem>>, %arg3: memref<80x32xf32, #tpu.memory_space<vmem>>, %arg4: memref<48x96xf32, #tpu.memory_space<vmem>>, %arg5: memref<3x96xf32, #tpu.memory_space<vmem>>, %arg6: memref<4x16xf32, #tpu.memory_space<vmem>>) attributes {dimension_semantics = [], scalar_prefetch = 0 : i64, scratch_operands = 0 : i64, tpu.core_type = #tpu.core_type<tc>} {
    %c0 = arith.constant 0 : index
    %c0_0 = arith.constant 0 : index
    %0 = vector.load %arg0[%c0, %c0_0] : memref<32x16xf32, #tpu.memory_space<vmem>>, vector<32x16xf32>
    %c0_1 = arith.constant 0 : index
    %c0_2 = arith.constant 0 : index
    %1 = vector.load %arg1[%c0_1, %c0_2] : memref<24x32xf32, #tpu.memory_space<vmem>>, vector<24x32xf32>
    %c0_3 = arith.constant 0 : index
    %c0_4 = arith.constant 0 : index
    %2 = vector.load %arg2[%c0_3, %c0_4] : memref<4x32xf32, #tpu.memory_space<vmem>>, vector<4x32xf32>
    %c0_5 = arith.constant 0 : index
    %c0_6 = arith.constant 0 : index
    %3 = vector.load %arg3[%c0_5, %c0_6] : memref<80x32xf32, #tpu.memory_space<vmem>>, vector<80x32xf32>
    %4 = vector.extract_strided_slice %3 {offsets = [0, 0], sizes = [32, 32], strides = [1, 1]} : vector<80x32xf32> to vector<32x32xf32>
    %5 = vector.extract_strided_slice %3 {offsets = [32, 0], sizes = [16, 32], strides = [1, 1]} : vector<80x32xf32> to vector<16x32xf32>
    %6 = vector.extract_strided_slice %3 {offsets = [48, 0], sizes = [32, 32], strides = [1, 1]} : vector<80x32xf32> to vector<32x32xf32>
    %c0_7 = arith.constant 0 : index
    %c0_8 = arith.constant 0 : index
    %7 = vector.load %arg4[%c0_7, %c0_8] : memref<48x96xf32, #tpu.memory_space<vmem>>, vector<48x96xf32>
    %8 = vector.extract_strided_slice %7 {offsets = [0, 0], sizes = [16, 96], strides = [1, 1]} : vector<48x96xf32> to vector<16x96xf32>
    %9 = vector.extract_strided_slice %7 {offsets = [16, 0], sizes = [32, 96], strides = [1, 1]} : vector<48x96xf32> to vector<32x96xf32>
    %c0_9 = arith.constant 0 : index
    %c0_10 = arith.constant 0 : index
    %10 = vector.load %arg5[%c0_9, %c0_10] : memref<3x96xf32, #tpu.memory_space<vmem>>, vector<1x32xf32>
    %c1 = arith.constant 1 : index
    %c0_11 = arith.constant 0 : index
    %11 = vector.load %arg5[%c1, %c0_11] : memref<3x96xf32, #tpu.memory_space<vmem>>, vector<1x96xf32>
    %c2 = arith.constant 2 : index
    %c0_12 = arith.constant 0 : index
    %12 = vector.load %arg5[%c2, %c0_12] : memref<3x96xf32, #tpu.memory_space<vmem>>, vector<1x96xf32>
    %13 = vector.shape_cast %2 : vector<4x32xf32> to vector<4x1x32xf32>
    %cst = arith.constant dense<0.000000e+00> : vector<24x32xf32>
    %14 = tpu.matmul %1, %4, %cst {dimension_numbers = #tpu.dot_dimension_numbers<[1], [0], [0], [1], [0, 0, 1, 1], [], []>} : vector<24x32xf32>, vector<32x32xf32>, vector<24x32xf32> -> vector<24x32xf32>
    %15 = vector.broadcast %10 : vector<1x32xf32> to vector<24x32xf32>
    %16 = arith.addf %14, %15 : vector<24x32xf32>
    %17 = math.tanh %16 : vector<24x32xf32>
    %18 = vector.shape_cast %17 : vector<24x32xf32> to vector<4x6x32xf32>
    %19 = vector.broadcast %13 : vector<4x1x32xf32> to vector<4x6x32xf32>
    %20 = arith.mulf %18, %19 : vector<4x6x32xf32>
    %cst_13 = arith.constant dense<0.000000e+00> : vector<4x6xf32>
    %21 = vector.multi_reduction <add>, %20, %cst_13 [2] : vector<4x6x32xf32> to vector<4x6xf32>
    %cst_14 = arith.constant dense<0xFF800000> : vector<4xf32>
    %22 = vector.multi_reduction <maximumf>, %21, %cst_14 [1] : vector<4x6xf32> to vector<4xf32>
    %23 = vector.shape_cast %22 : vector<4xf32> to vector<4x1xf32>
    %24 = vector.broadcast %23 : vector<4x1xf32> to vector<4x6xf32>
    %25 = arith.subf %21, %24 : vector<4x6xf32>
    %26 = math.exp %25 : vector<4x6xf32>
    %cst_15 = arith.constant dense<0.000000e+00> : vector<4xf32>
    %27 = vector.multi_reduction <add>, %26, %cst_15 [1] : vector<4x6xf32> to vector<4xf32>
    %28 = vector.shape_cast %27 : vector<4xf32> to vector<4x1xf32>
    %29 = tpu.reciprocal %28 {approx = true} : vector<4x1xf32> -> vector<4x1xf32>
    %30 = vector.broadcast %29 : vector<4x1xf32> to vector<4x6xf32>
    %31 = arith.mulf %26, %30 : vector<4x6xf32>
    %32 = vector.shape_cast %1 : vector<24x32xf32> to vector<4x6x32xf32>
    %33 = vector.shape_cast %31 : vector<4x6xf32> to vector<4x6x1xf32>
    %34 = vector.broadcast %33 : vector<4x6x1xf32> to vector<4x6x32xf32>
    %35 = arith.mulf %34, %32 : vector<4x6x32xf32>
    %cst_16 = arith.constant dense<0.000000e+00> : vector<4x32xf32>
    %36 = vector.multi_reduction <add>, %35, %cst_16 [1] : vector<4x6x32xf32> to vector<4x32xf32>
    %cst_17 = arith.constant dense<0.000000e+00> : vector<32x32xf32>
    %37 = tpu.matmul %0, %5, %cst_17 {dimension_numbers = #tpu.dot_dimension_numbers<[1], [0], [0], [1], [0, 0, 1, 1], [], []>} : vector<32x16xf32>, vector<16x32xf32>, vector<32x32xf32> -> vector<32x32xf32>
    %38 = vector.shape_cast %37 : vector<32x32xf32> to vector<4x8x32xf32>
    %39 = vector.shape_cast %0 : vector<32x16xf32> to vector<4x8x16xf32>
    %cst_18 = arith.constant dense<0.000000e+00> : vector<4x32xf32>
    %40 = tpu.matmul %36, %6, %cst_18 {dimension_numbers = #tpu.dot_dimension_numbers<[1], [0], [0], [1], [0, 0, 1, 1], [], []>} : vector<4x32xf32>, vector<32x32xf32>, vector<4x32xf32> -> vector<4x32xf32>
    %41 = vector.shape_cast %40 : vector<4x32xf32> to vector<4x1x32xf32>
    %42 = vector.broadcast %41 : vector<4x1x32xf32> to vector<4x8x32xf32>
    %43 = arith.addf %38, %42 : vector<4x8x32xf32>
    %44 = math.tanh %43 : vector<4x8x32xf32>
    %45 = vector.broadcast %13 : vector<4x1x32xf32> to vector<4x8x32xf32>
    %46 = arith.mulf %44, %45 : vector<4x8x32xf32>
    %cst_19 = arith.constant dense<0.000000e+00> : vector<4x8xf32>
    %47 = vector.multi_reduction <add>, %46, %cst_19 [2] : vector<4x8x32xf32> to vector<4x8xf32>
    %cst_20 = arith.constant dense<0xFF800000> : vector<4xf32>
    %48 = vector.multi_reduction <maximumf>, %47, %cst_20 [1] : vector<4x8xf32> to vector<4xf32>
    %49 = vector.shape_cast %48 : vector<4xf32> to vector<4x1xf32>
    %50 = vector.broadcast %49 : vector<4x1xf32> to vector<4x8xf32>
    %51 = arith.subf %47, %50 : vector<4x8xf32>
    %52 = math.exp %51 : vector<4x8xf32>
    %cst_21 = arith.constant dense<0.000000e+00> : vector<4xf32>
    %53 = vector.multi_reduction <add>, %52, %cst_21 [1] : vector<4x8xf32> to vector<4xf32>
    %54 = vector.shape_cast %53 : vector<4xf32> to vector<4x1xf32>
    %55 = tpu.reciprocal %54 {approx = true} : vector<4x1xf32> -> vector<4x1xf32>
    %56 = vector.broadcast %55 : vector<4x1xf32> to vector<4x8xf32>
    %57 = arith.mulf %52, %56 : vector<4x8xf32>
    %58 = vector.shape_cast %57 : vector<4x8xf32> to vector<4x8x1xf32>
    %59 = vector.broadcast %58 : vector<4x8x1xf32> to vector<4x8x16xf32>
    %60 = arith.mulf %59, %39 : vector<4x8x16xf32>
    %cst_22 = arith.constant dense<0.000000e+00> : vector<4x16xf32>
    %61 = vector.multi_reduction <add>, %60, %cst_22 [1] : vector<4x8x16xf32> to vector<4x16xf32>
    %cst_23 = arith.constant dense<0.000000e+00> : vector<4x96xf32>
    %62 = tpu.matmul %61, %8, %cst_23 {dimension_numbers = #tpu.dot_dimension_numbers<[1], [0], [0], [1], [0, 0, 1, 1], [], []>} : vector<4x16xf32>, vector<16x96xf32>, vector<4x96xf32> -> vector<4x96xf32>
    %63 = vector.broadcast %11 : vector<1x96xf32> to vector<4x96xf32>
    %64 = arith.addf %62, %63 : vector<4x96xf32>
    %cst_24 = arith.constant dense<0.000000e+00> : vector<4x96xf32>
    %65 = tpu.matmul %36, %9, %cst_24 {dimension_numbers = #tpu.dot_dimension_numbers<[1], [0], [0], [1], [0, 0, 1, 1], [], []>} : vector<4x32xf32>, vector<32x96xf32>, vector<4x96xf32> -> vector<4x96xf32>
    %66 = vector.broadcast %12 : vector<1x96xf32> to vector<4x96xf32>
    %67 = arith.addf %65, %66 : vector<4x96xf32>
    %68 = vector.extract_strided_slice %64 {offsets = [0, 0], sizes = [4, 32], strides = [1, 1]} : vector<4x96xf32> to vector<4x32xf32>
    %69 = vector.extract_strided_slice %67 {offsets = [0, 0], sizes = [4, 32], strides = [1, 1]} : vector<4x96xf32> to vector<4x32xf32>
    %70 = arith.addf %68, %69 : vector<4x32xf32>
    %71 = arith.negf %70 : vector<4x32xf32>
    %72 = math.exp %71 : vector<4x32xf32>
    %cst_25 = arith.constant 1.000000e+00 : f32
    %73 = vector.broadcast %cst_25 : f32 to vector<4x32xf32>
    %74 = arith.addf %73, %72 : vector<4x32xf32>
    %75 = arith.divf %73, %74 : vector<4x32xf32>
    %76 = vector.extract_strided_slice %64 {offsets = [0, 32], sizes = [4, 32], strides = [1, 1]} : vector<4x96xf32> to vector<4x32xf32>
    %77 = vector.extract_strided_slice %67 {offsets = [0, 32], sizes = [4, 32], strides = [1, 1]} : vector<4x96xf32> to vector<4x32xf32>
    %78 = arith.addf %76, %77 : vector<4x32xf32>
    %79 = arith.negf %78 : vector<4x32xf32>
    %80 = math.exp %79 : vector<4x32xf32>
    %cst_26 = arith.constant 1.000000e+00 : f32
    %81 = vector.broadcast %cst_26 : f32 to vector<4x32xf32>
    %82 = arith.addf %81, %80 : vector<4x32xf32>
    %83 = arith.divf %81, %82 : vector<4x32xf32>
    %84 = vector.extract_strided_slice %64 {offsets = [0, 64], sizes = [4, 32], strides = [1, 1]} : vector<4x96xf32> to vector<4x32xf32>
    %85 = vector.extract_strided_slice %67 {offsets = [0, 64], sizes = [4, 32], strides = [1, 1]} : vector<4x96xf32> to vector<4x32xf32>
    %86 = arith.mulf %75, %85 : vector<4x32xf32>
    %87 = arith.addf %84, %86 : vector<4x32xf32>
    %88 = math.tanh %87 : vector<4x32xf32>
    %cst_27 = arith.constant 1.000000e+00 : f32
    %89 = vector.broadcast %cst_27 : f32 to vector<4x32xf32>
    %90 = arith.subf %89, %83 : vector<4x32xf32>
    %91 = arith.mulf %90, %88 : vector<4x32xf32>
    %92 = arith.mulf %83, %36 : vector<4x32xf32>
    %93 = arith.addf %91, %92 : vector<4x32xf32>
    %cst_28 = arith.constant dense<0.000000e+00> : vector<4x32xf32>
    %94 = tpu.matmul %93, %6, %cst_28 {dimension_numbers = #tpu.dot_dimension_numbers<[1], [0], [0], [1], [0, 0, 1, 1], [], []>} : vector<4x32xf32>, vector<32x32xf32>, vector<4x32xf32> -> vector<4x32xf32>
    %95 = vector.shape_cast %94 : vector<4x32xf32> to vector<4x1x32xf32>
    %96 = vector.broadcast %95 : vector<4x1x32xf32> to vector<4x8x32xf32>
    %97 = arith.addf %38, %96 : vector<4x8x32xf32>
    %98 = math.tanh %97 : vector<4x8x32xf32>
    %99 = vector.broadcast %13 : vector<4x1x32xf32> to vector<4x8x32xf32>
    %100 = arith.mulf %98, %99 : vector<4x8x32xf32>
    %cst_29 = arith.constant dense<0.000000e+00> : vector<4x8xf32>
    %101 = vector.multi_reduction <add>, %100, %cst_29 [2] : vector<4x8x32xf32> to vector<4x8xf32>
    %cst_30 = arith.constant dense<0xFF800000> : vector<4xf32>
    %102 = vector.multi_reduction <maximumf>, %101, %cst_30 [1] : vector<4x8xf32> to vector<4xf32>
    %103 = vector.shape_cast %102 : vector<4xf32> to vector<4x1xf32>
    %104 = vector.broadcast %103 : vector<4x1xf32> to vector<4x8xf32>
    %105 = arith.subf %101, %104 : vector<4x8xf32>
    %106 = math.exp %105 : vector<4x8xf32>
    %cst_31 = arith.constant dense<0.000000e+00> : vector<4xf32>
    %107 = vector.multi_reduction <add>, %106, %cst_31 [1] : vector<4x8xf32> to vector<4xf32>
    %108 = vector.shape_cast %107 : vector<4xf32> to vector<4x1xf32>
    %109 = tpu.reciprocal %108 {approx = true} : vector<4x1xf32> -> vector<4x1xf32>
    %110 = vector.broadcast %109 : vector<4x1xf32> to vector<4x8xf32>
    %111 = arith.mulf %106, %110 : vector<4x8xf32>
    %112 = tpu.concatenate %57, %111 in 1 : vector<4x8xf32>, vector<4x8xf32> -> vector<4x16xf32>
    %c0_32 = arith.constant 0 : index
    %c0_33 = arith.constant 0 : index
    %113 = vector.load %arg6[%c0_32, %c0_33] : memref<4x16xf32, #tpu.memory_space<vmem>>, vector<4x16xf32>
    tpu.vector_store %arg6[%c0_32, %c0_33], %112 {strides = array<i32>} : memref<4x16xf32, #tpu.memory_space<vmem>>, vector<4x16xf32>,
    return
  }
}

</mosaic_0001>

<llo_original>
// kernel: tpu_custom_call.1
$region0: #{tpu_custom_call.1}
  #allocation0 [shape = 'u32[]', space=smem, size = 0x4, offset = 0x4, fixed_abs, tag = 'smem constant byte address 0x4 - core index']
  #allocation1 [shape = 'u32[144,128]{1,0:T(1,128)}', space=vmem, size = 0x12000, scoped, tag = 'internal scratch']
  %s0 = inlined_call_operand.vmem [shape: f32[32,16], index: 0, kind: input, shape index: {}]
  %s1 = inlined_call_operand.vmem [shape: f32[24,32], index: 1, kind: input, shape index: {}]
  %s2 = inlined_call_operand.vmem [shape: f32[4,32], index: 2, kind: input, shape index: {}]
  %s3 = inlined_call_operand.vmem [shape: f32[80,32], index: 3, kind: input, shape index: {}]
  %s4 = inlined_call_operand.vmem [shape: f32[48,96], index: 4, kind: input, shape index: {}]
  %s5 = inlined_call_operand.vmem [shape: f32[3,96], index: 5, kind: input, shape index: {}]
  %s6 = inlined_call_operand.hbm [shape: f32[4,16], index: 6, kind: output, shape index: {}]
  %s7 = sld [smem:[#allocation0]]
  $region34: #{tpu_custom_call.1} parent=0
    _
  %s9 = ssub.s32 1, %s7
  %s10 = scalar_select 0, %s9, %s7
  $region1: #{tpu_custom_call.1} parent=0
    #allocation2 [shape = 'u8[2048]{0}', space=vmem, size = 0x800, scoped, tag = 'output window, operand 0, single buffered']
    #allocation3 [shape = 's32[1]{0}', space=sflag, size = 0x4, scoped, tag = 'scoped memory for tpu_custom_call.1']
    %11 = vsyncpa [#allocation3], 0
    // Predicated region
    $region2: #{tpu_custom_call.1} parent=1 // pred_check
      _
    $region3: #{tpu_custom_call.1} parent=1 // pred_check_branch
      %13 = sbr.rel (0) target = $region5
    $region4: #{tpu_custom_call.1} parent=1 // pred_region
      _
    $region5: #{tpu_custom_call.1} parent=1 // pred_fallthru
      _
    // Predicated region
    $region6: #{tpu_custom_call.1} parent=1 // pred_check
      _
    $region7: #{tpu_custom_call.1} parent=1 // pred_check_branch
      %15 = sbr.rel (0) target = $region9
    $region8: #{tpu_custom_call.1} parent=1 // pred_region
      _
    $region9: #{tpu_custom_call.1} parent=1 // pred_fallthru
      _
    // Predicated region
    $region10: #{tpu_custom_call.1} parent=1 // pred_check
      _
    $region11: #{tpu_custom_call.1} parent=1 // pred_check_branch
      %17 = sbr.rel (0) target = $region13
    $region12: #{tpu_custom_call.1} parent=1 // pred_region
      _
    $region13: #{tpu_custom_call.1} parent=1 // pred_fallthru
      _
    // Predicated region
    $region14: #{tpu_custom_call.1} parent=1 // pred_check
      _
    $region15: #{tpu_custom_call.1} parent=1 // pred_check_branch
      %19 = sbr.rel (0) target = $region17
    $region16: #{tpu_custom_call.1} parent=1 // pred_region
      _
    $region17: #{tpu_custom_call.1} parent=1 // pred_fallthru
      _
    // Predicated region
    $region18: #{tpu_custom_call.1} parent=1 // pred_check
      _
    $region19: #{tpu_custom_call.1} parent=1 // pred_check_branch
      %21 = sbr.rel (0) target = $region21
    $region20: #{tpu_custom_call.1} parent=1 // pred_region
      _
    $region21: #{tpu_custom_call.1} parent=1 // pred_fallthru
      _
    // Predicated region
    $region22: #{tpu_custom_call.1} parent=1 // pred_check
      _
    $region23: #{tpu_custom_call.1} parent=1 // pred_check_branch
      %23 = sbr.rel (0) target = $region25
    $region24: #{tpu_custom_call.1} parent=1 // pred_region
      _
    $region25: #{tpu_custom_call.1} parent=1 // pred_fallthru
      _
    %v24 = vld [vmem:[%s0] sm:$0xff]
    %v25 = vld [vmem:[%s0 + $0x8] sm:$0xff]
    %v26 = vld [vmem:[%s0 + $0x10] sm:$0xff]
    %v27 = vld [vmem:[%s0 + $0x18] sm:$0xff]
    %v28 = vld [vmem:[%s1] sm:$0xff]
    %v29 = vld [vmem:[%s1 + $0x8] sm:$0xff]
    %v30 = vld [vmem:[%s1 + $0x10] sm:$0xff]
    %v31 = vld [vmem:[%s2] sm:$0xf]
    %v32 = vld [vmem:[%s3] sm:$0xff]
    %v33 = vld [vmem:[%s3 + $0x8] sm:$0xff]
    %v34 = vld [vmem:[%s3 + $0x10] sm:$0xff]
    %v35 = vld [vmem:[%s3 + $0x18] sm:$0xff]
    %v36 = vld [vmem:[%s3 + $0x20] sm:$0xff]
    %v37 = vld [vmem:[%s3 + $0x28] sm:$0xff]
    %v38 = vld [vmem:[%s3 + $0x30] sm:$0xff]
    %v39 = vld [vmem:[%s3 + $0x38] sm:$0xff]
    %v40 = vld [vmem:[%s3 + $0x40] sm:$0xff]
    %v41 = vld [vmem:[%s3 + $0x48] sm:$0xff]
    %v42 = vld [vmem:[%s4] sm:$0xff]
    %v43 = vld [vmem:[%s4 + $0x8] sm:$0xff]
    %v44 = vld [vmem:[%s4 + $0x10] sm:$0xff]
    %v45 = vld [vmem:[%s4 + $0x18] sm:$0xff]
    %v46 = vld [vmem:[%s4 + $0x20] sm:$0xff]
    %v47 = vld [vmem:[%s4 + $0x28] sm:$0xff]
    %v48 = vld [vmem:[%s5] sm:$0x1]
    %v49 = vld [vmem:[%s5 + $0x1] sm:$0x1]
    %v50 = vld [vmem:[%s5 + $0x2] sm:$0x1]
    %v53 = vunpack.c.l.s4 1966171168
    %v54 = vunpack.c.0.s8 %v53
    %v55 = vlaneseq
    %v56 = vshrl.u32 %v55, 7
    %v57 = vsub.s32 %v54, %v56
    %v58 = vrot.slane %v31, %v57
    %v59 = vcombine.high %v58, %v58
    %v61 = vunpack.c.l.s4 1966171168
    %v62 = vunpack.c.0.s8 %v61
    %v63 = vlaneseq
    %v64 = vshrl.u32 %v63, 7
    %v65 = vsub.s32 %v62, %v64
    %v66 = vrot.slane %v58, %v65
    %v68 = vunpack.c.l.s4 1966171168
    %v69 = vunpack.c.0.s8 %v68
    %v70 = vlaneseq
    %v71 = vshrl.u32 %v70, 7
    %v72 = vsub.s32 %v69, %v71
    %v73 = vrot.slane %v59, %v72
    %v74 = vcombine.high %v66, %v66
    %v75 = vcombine.high %v73, %v73
    %v76 = vlaneseq
    %v77 = vshrl.u32 %v76, 7
    %v78 = vsub.s32 0, %v77
    %v79 = vrot.slane %v48, %v78
    %vm80 = vcmask 261120
    %v82 = vsel %vm80, %v28, 0
    %v85 = vsel %vm80, %v29, 0
    %v88 = vsel %vm80, %v30, 0
    %90 = vmatprep.subr.mxu0 0.0
    %91 = vmatpush1.msra.mxu0 0.0
    %92 = vmatprep.subr.mxu0 0.0
    %93 = vmatpush1.msra.mxu0 0.0
    %94 = vmatprep.subr.mxu0 0.0
    %95 = vmatpush1.msra.mxu0 0.0
    %96 = vmatprep.subr.mxu0 0.0
    %97 = vmatpush1.msra.mxu0 0.0
    %98 = vmatprep.subr.mxu0 0.0
    %99 = vmatpush1.msra.mxu0 0.0
    %100 = vmatprep.subr.mxu0 0.0
    %101 = vmatpush1.msra.mxu0 0.0
    %102 = vmatprep.subr.mxu0 0.0
    %103 = vmatpush1.msra.mxu0 0.0
    %104 = vmatprep.subr.mxu0 0.0
    %105 = vmatpush1.msra.mxu0 0.0
    %106 = vmatprep.subr.mxu0 0.0
    %107 = vmatpush1.msra.mxu0 0.0
    %108 = vmatprep.subr.mxu0 0.0
    %109 = vmatpush1.msra.mxu0 0.0
    %110 = vmatprep.subr.mxu0 0.0
    %111 = vmatpush1.msra.mxu0 0.0
    %112 = vmatprep.subr.mxu0 0.0
    %113 = vmatpush1.msra.mxu0 0.0
    %114 = vmatprep.subr.mxu0 0.0
    %115 = vmatpush1.msra.mxu0 %v35
    %116 = vmatprep.subr.mxu0 0.0
    %117 = vmatpush1.msra.mxu0 %v34
    %118 = vmatprep.subr.mxu0 0.0
    %119 = vmatpush1.msra.mxu0 %v33
    %120 = vmatprep.subr.mxu0 0.0
    %121 = vmatpush1.msra.mxu0 %v32
    %122 = vmatprep.subr.mxu0 0.0
    %123 = vmatpush2.msra.mxu0 0.0
    %124 = vmatprep.subr.mxu0 0.0
    %125 = vmatpush2.msra.mxu0 0.0
    %126 = vmatprep.subr.mxu0 0.0
    %127 = vmatpush2.msra.mxu0 0.0
    %128 = vmatprep.subr.mxu0 0.0
    %129 = vmatpush2.msra.mxu0 0.0
    %130 = vmatprep.subr.mxu0 0.0
    %131 = vmatpush2.msra.mxu0 0.0
    %132 = vmatprep.subr.mxu0 0.0
    %133 = vmatpush2.msra.mxu0 0.0
    %134 = vmatprep.subr.mxu0 0.0
    %135 = vmatpush2.msra.mxu0 0.0
    %136 = vmatprep.subr.mxu0 0.0
    %137 = vmatpush2.msra.mxu0 0.0
    %138 = vmatprep.subr.mxu0 0.0
    %139 = vmatpush2.msra.mxu0 0.0
    %140 = vmatprep.subr.mxu0 0.0
    %141 = vmatpush2.msra.mxu0 0.0
    %142 = vmatprep.subr.mxu0 0.0
    %143 = vmatpush2.msra.mxu0 0.0
    %144 = vmatprep.subr.mxu0 0.0
    %145 = vmatpush2.msra.mxu0 0.0
    %146 = vmatprep.subr.mxu0 0.0
    %147 = vmatpush2.msra.mxu0 0.0
    %148 = vmatprep.subr.mxu0 0.0
    %149 = vmatpush2.msra.mxu0 0.0
    %150 = vmatprep.subr.mxu0 0.0
    %151 = vmatpush2.msra.mxu0 0.0
    %152 = vmatprep.subr.mxu0 0.0
    %153 = vmatpush2.msra.mxu0 0.0
    %154 = vmatprep.mubr.f32.mxu0 0.0
    %155 = vmatmul.mubr.f32.gmra.mxu0 %v82
    %v156 = vpop.f32.mrf.mxu0
    %v157 = vadd.f32 %v79, %v156
    %v158 = vpop.f32.mrf.mxu0
    %159 = vmatprep.mubr.f32.mxu0 0.0
    %160 = vmatmul.mubr.f32.gmra.mxu0 %v85
    %v161 = vpop.f32.mrf.mxu0
    %v162 = vadd.f32 %v79, %v161
    %v163 = vpop.f32.mrf.mxu0
    %164 = vmatprep.mubr.f32.mxu0 0.0
    %165 = vmatmul.mubr.f32.gmra.mxu0 %v88
    %v166 = vpop.f32.mrf.mxu0
    %v167 = vadd.f32 %v79, %v166
    %v168 = vpop.f32.mrf.mxu0
    %169 = vdwg.mxu0
    %v170 = vtanh.pop %v157
    %v171 = vtanh.pop %v162
    %v172 = vtanh.pop %v167
    %v176 = vcombine.high %v170, %v170
    %v178 = vunpack.c.l.s4 1983009808
    %v179 = vunpack.c.0.s8 %v178
    %v180 = vlaneseq
    %v181 = vshrl.u32 %v180, 7
    %v182 = vsub.s32 %v179, %v181
    %v183 = vrot.slane %v170, %v182
    %v185 = vunpack.c.l.s4 1983009808
    %v186 = vunpack.c.0.s8 %v185
    %v187 = vlaneseq
    %v188 = vshrl.u32 %v187, 7
    %v189 = vsub.s32 %v186, %v188
    %v190 = vrot.slane %v176, %v189
    %v191 = vcombine.high %v183, %v183
    %v192 = vcombine.high %v190, %v190
    %v193 = vcombine.high %v171, %v171
    %v195 = vunpack.c.l.s4 1983009808
    %v196 = vunpack.c.0.s8 %v195
    %v197 = vlaneseq
    %v198 = vshrl.u32 %v197, 7
    %v199 = vsub.s32 %v196, %v198
    %v200 = vrot.slane %v171, %v199
    %v202 = vunpack.c.l.s4 1983009808
    %v203 = vunpack.c.0.s8 %v202
    %v204 = vlaneseq
    %v205 = vshrl.u32 %v204, 7
    %v206 = vsub.s32 %v203, %v205
    %v207 = vrot.slane %v193, %v206
    %v208 = vcombine.high %v200, %v200
    %v209 = vcombine.high %v207, %v207
    %v210 = vcombine.high %v172, %v172
    %v212 = vunpack.c.l.s4 1983009808
    %v213 = vunpack.c.0.s8 %v212
    %v214 = vlaneseq
    %v215 = vshrl.u32 %v214, 7
    %v216 = vsub.s32 %v213, %v215
    %v217 = vrot.slane %v172, %v216
    %v219 = vunpack.c.l.s4 1983009808
    %v220 = vunpack.c.0.s8 %v219
    %v221 = vlaneseq
    %v222 = vshrl.u32 %v221, 7
    %v223 = vsub.s32 %v220, %v222
    %v224 = vrot.slane %v210, %v223
    %v225 = vcombine.high %v217, %v217
    %v226 = vcombine.high %v224, %v224
    %v239 = vlaneseq
    %v240 = vshrl.u32 %v239, 7
    %v241 = vsub.s32 0, %v240
    %v242 = vrot.slane %v66, %v241
    %v243 = vlaneseq
    %v244 = vshrl.u32 %v243, 7
    %v245 = vsub.s32 0, %v244
    %v246 = vrot.slane %v73, %v245
    %v247 = vlaneseq
    %v248 = vshrl.u32 %v247, 7
    %v249 = vsub.s32 0, %v248
    %v250 = vrot.slane %v74, %v249
    %v251 = vlaneseq
    %v252 = vshrl.u32 %v251, 7
    %v253 = vsub.s32 0, %v252
    %v254 = vrot.slane %v75, %v253
    %v255 = vcombine.high %v242, %v242
    %v257 = vunpack.c.l.s4 1983009808
    %v258 = vunpack.c.0.s8 %v257
    %v259 = vlaneseq
    %v260 = vshrl.u32 %v259, 7
    %v261 = vsub.s32 %v258, %v260
    %v262 = vrot.slane %v242, %v261
    %v264 = vunpack.c.l.s4 1983009808
    %v265 = vunpack.c.0.s8 %v264
    %v266 = vlaneseq
    %v267 = vshrl.u32 %v266, 7
    %v268 = vsub.s32 %v265, %v267
    %v269 = vrot.slane %v255, %v268
    %v270 = vcombine.high %v262, %v262
    %v271 = vcombine.high %v246, %v246
    %v273 = vunpack.c.l.s4 1983009808
    %v274 = vunpack.c.0.s8 %v273
    %v275 = vlaneseq
    %v276 = vshrl.u32 %v275, 7
    %v277 = vsub.s32 %v274, %v276
    %v278 = vrot.slane %v246, %v277
    %v280 = vunpack.c.l.s4 1983009808
    %v281 = vunpack.c.0.s8 %v280
    %v282 = vlaneseq
    %v283 = vshrl.u32 %v282, 7
    %v284 = vsub.s32 %v281, %v283
    %v285 = vrot.slane %v271, %v284
    %v286 = vcombine.high %v278, %v278
    %v287 = vcombine.high %v250, %v250
    %v289 = vunpack.c.l.s4 1983009808
    %v290 = vunpack.c.0.s8 %v289
    %v291 = vlaneseq
    %v292 = vshrl.u32 %v291, 7
    %v293 = vsub.s32 %v290, %v292
    %v294 = vrot.slane %v250, %v293
    %v296 = vunpack.c.l.s4 1983009808
    %v297 = vunpack.c.0.s8 %v296
    %v298 = vlaneseq
    %v299 = vshrl.u32 %v298, 7
    %v300 = vsub.s32 %v297, %v299
    %v301 = vrot.slane %v287, %v300
    %v302 = vcombine.high %v294, %v294
    %v303 = vcombine.high %v254, %v254
    %v305 = vunpack.c.l.s4 1983009808
    %v306 = vunpack.c.0.s8 %v305
    %v307 = vlaneseq
    %v308 = vshrl.u32 %v307, 7
    %v309 = vsub.s32 %v306, %v308
    %v310 = vrot.slane %v254, %v309
    %v312 = vunpack.c.l.s4 1983009808
    %v313 = vunpack.c.0.s8 %v312
    %v314 = vlaneseq
    %v315 = vshrl.u32 %v314, 7
    %v316 = vsub.s32 %v313, %v315
    %v317 = vrot.slane %v303, %v316
    %v318 = vcombine.high %v310, %v310
    %v331 = vmul.f32 %v183, %v262
    %v332 = vmul.f32 %v191, %v270
    %v333 = vmul.f32 %v190, %v269
    %v334 = vmul.f32 %v192, %v278
    %v335 = vmul.f32 %v200, %v286
    %v336 = vmul.f32 %v208, %v285
    %v337 = vmul.f32 %v207, %v294
    %v338 = vmul.f32 %v209, %v302
    %v339 = vmul.f32 %v217, %v301
    %v340 = vmul.f32 %v225, %v310
    %v341 = vmul.f32 %v224, %v318
    %v342 = vmul.f32 %v226, %v317
    %v355 = vcombine.low %v331, %v332
    %v357 = vunpack.c.l.s4 1983009808
    %v358 = vunpack.c.0.s8 %v357
    %v359 = vlaneseq
    %v360 = vshrl.u32 %v359, 7
    %v361 = vsub.s32 %v358, %v360
    %v362 = vrot.slane %v355, %v361
    %v364 = vunpack.c.l.s4 1983009808
    %v365 = vunpack.c.0.s8 %v364
    %v366 = vlaneseq
    %v367 = vshrl.u32 %v366, 7
    %v368 = vsub.s32 %v365, %v367
    %v369 = vrot.slane %v333, %v368
    %v370 = vcombine.low %v362, %v369
    %v371 = vcombine.low %v334, %v335
    %v373 = vunpack.c.l.s4 1983009808
    %v374 = vunpack.c.0.s8 %v373
    %v375 = vlaneseq
    %v376 = vshrl.u32 %v375, 7
    %v377 = vsub.s32 %v374, %v376
    %v378 = vrot.slane %v371, %v377
    %v380 = vunpack.c.l.s4 1983009808
    %v381 = vunpack.c.0.s8 %v380
    %v382 = vlaneseq
    %v383 = vshrl.u32 %v382, 7
    %v384 = vsub.s32 %v381, %v383
    %v385 = vrot.slane %v336, %v384
    %v386 = vcombine.low %v378, %v385
    %v387 = vcombine.low %v337, %v338
    %v389 = vunpack.c.l.s4 1983009808
    %v390 = vunpack.c.0.s8 %v389
    %v391 = vlaneseq
    %v392 = vshrl.u32 %v391, 7
    %v393 = vsub.s32 %v390, %v392
    %v394 = vrot.slane %v387, %v393
    %v396 = vunpack.c.l.s4 1983009808
    %v397 = vunpack.c.0.s8 %v396
    %v398 = vlaneseq
    %v399 = vshrl.u32 %v398, 7
    %v400 = vsub.s32 %v397, %v399
    %v401 = vrot.slane %v339, %v400
    %v402 = vcombine.low %v394, %v401
    %v403 = vcombine.low %v340, %v341
    %v405 = vunpack.c.l.s4 1983009808
    %v406 = vunpack.c.0.s8 %v405
    %v407 = vlaneseq
    %v408 = vshrl.u32 %v407, 7
    %v409 = vsub.s32 %v406, %v408
    %v410 = vrot.slane %v403, %v409
    %v412 = vunpack.c.l.s4 1983009808
    %v413 = vunpack.c.0.s8 %v412
    %v414 = vlaneseq
    %v415 = vshrl.u32 %v414, 7
    %v416 = vsub.s32 %v413, %v415
    %v417 = vrot.slane %v342, %v416
    %v418 = vcombine.low %v410, %v417
    %vm423 = vcmask 259072
    %v424 = vsel %vm423, %v370, 0.0
    %425 = vadd.xlane.f32.xlu0 %v424
    %v426 = vpop.xlane.xlu0 %425
    %v427 = vsel %vm423, %v386, 0.0
    %428 = vadd.xlane.f32.xlu0 %v427
    %v429 = vpop.xlane.xlu0 %428
    %v430 = vsel %vm423, %v402, 0.0
    %431 = vadd.xlane.f32.xlu0 %v430
    %v432 = vpop.xlane.xlu0 %431
    %v433 = vsel %vm423, %v418, 0.0
    %434 = vadd.xlane.f32.xlu0 %v433
    %v435 = vpop.xlane.xlu0 %434
    %v440 = vlaneseq
    %v441 = vand.u32 %v440, 127
    %v442 = vlaneseq
    %v443 = vshrl.u32 %v442, 7
    %v444 = vsub.s32 %v441, %v443
    %v445 = vrot.slane %v426, %v444
    %v446 = vlaneseq
    %v447 = vshrl.u32 %v446, 7
    %v448 = vsub.s32 %v441, %v447
    %v449 = vrot.slane %v429, %v448
    %v450 = vlaneseq
    %v451 = vshrl.u32 %v450, 7
    %v452 = vsub.s32 %v441, %v451
    %v453 = vrot.slane %v432, %v452
    %v454 = vlaneseq
    %v455 = vshrl.u32 %v454, 7
    %v456 = vsub.s32 %v441, %v455
    %v457 = vrot.slane %v435, %v456
    %vm458 = vcmask 1041409
    %v459 = vsel %vm458, %v449, %v445
    %vm460 = vcmask 1042434
    %v461 = vsel %vm460, %v453, %v459
    %vm462 = vcmask 1043459
    %v463 = vsel %vm462, %v457, %v461
    %vm465 = vcmask 44032
    %v466 = vsel %vm465, %v463, -inf
    %467 = vmax.xlane.f32.xlu0 %v466
    %v468 = vpop.xlane.xlu0 %467
    %v470 = vlaneseq
    %v471 = vshrl.u32 %v470, 7
    %v472 = vsub.s32 0, %v471
    %v473 = vrot.slane %v468, %v472
    %v474 = vlaneseq
    %v475 = vshrl.u32 %v474, 7
    %v476 = vsub.s32 1, %v475
    %v477 = vrot.slane %v468, %v476
    %v478 = vlaneseq
    %v479 = vshrl.u32 %v478, 7
    %v480 = vsub.s32 2, %v479
    %v481 = vrot.slane %v468, %v480
    %v482 = vlaneseq
    %v483 = vshrl.u32 %v482, 7
    %v484 = vsub.s32 3, %v483
    %v485 = vrot.slane %v468, %v484
    %v490 = vsub.f32 %v426, %v473
    %v491 = vsub.f32 %v429, %v477
    %v492 = vsub.f32 %v432, %v481
    %v493 = vsub.f32 %v435, %v485
    %v494 = vmul.f32 %v490, 1.442695
    %v495 = vpow.pop %v494
    %v496 = vmul.f32 %v491, 1.442695
    %v497 = vpow.pop %v496
    %v498 = vmul.f32 %v492, 1.442695
    %v499 = vpow.pop %v498
    %v500 = vmul.f32 %v493, 1.442695
    %v501 = vpow.pop %v500
    %506 = vset.pattern.permute.xlu0 0
    %507 = vperm.xlu0 %506, %v495
    %v508 = vpop.permute.xlu0 %507
    %509 = vset.pattern.permute.xlu0 0
    %510 = vperm.xlu0 %509, %v497
    %v511 = vpop.permute.xlu0 %510
    %512 = vset.pattern.permute.xlu0 0
    %513 = vperm.xlu0 %512, %v499
    %v514 = vpop.permute.xlu0 %513
    %515 = vset.pattern.permute.xlu0 0
    %516 = vperm.xlu0 %515, %v501
    %v517 = vpop.permute.xlu0 %516
    %v518 = vlaneseq
    %v519 = vshrl.u32 %v518, 7
    %v520 = vsub.s32 %v441, %v519
    %v521 = vrot.slane %v508, %v520
    %v522 = vlaneseq
    %v523 = vshrl.u32 %v522, 7
    %v524 = vsub.s32 %v441, %v523
    %v525 = vrot.slane %v511, %v524
    %v526 = vlaneseq
    %v527 = vshrl.u32 %v526, 7
    %v528 = vsub.s32 %v441, %v527
    %v529 = vrot.slane %v514, %v528
    %v530 = vlaneseq
    %v531 = vshrl.u32 %v530, 7
    %v532 = vsub.s32 %v441, %v531
    %v533 = vrot.slane %v517, %v532
    %v534 = vsel %vm458, %v525, %v521
    %v535 = vsel %vm460, %v529, %v534
    %v536 = vsel %vm462, %v533, %v535
    %v538 = vsel %vm465, %v536, 0.0
    %539 = vadd.xlane.f32.xlu0 %v538
    %v540 = vpop.xlane.xlu0 %539
    %v541 = vrcp.pop %v540
    %v543 = vlaneseq
    %v544 = vshrl.u32 %v543, 7
    %v545 = vsub.s32 0, %v544
    %v546 = vrot.slane %v541, %v545
    %v547 = vlaneseq
    %v548 = vshrl.u32 %v547, 7
    %v549 = vsub.s32 1, %v548
    %v550 = vrot.slane %v541, %v549
    %v551 = vlaneseq
    %v552 = vshrl.u32 %v551, 7
    %v553 = vsub.s32 2, %v552
    %v554 = vrot.slane %v541, %v553
    %v555 = vlaneseq
    %v556 = vshrl.u32 %v555, 7
    %v557 = vsub.s32 3, %v556
    %v558 = vrot.slane %v541, %v557
    %v563 = vmul.f32 %v495, %v546
    %v564 = vmul.f32 %v497, %v550
    %v565 = vmul.f32 %v499, %v554
    %v566 = vmul.f32 %v501, %v558
    %v567 = vcombine.high %v28, %v28
    %v569 = vunpack.c.l.s4 1983009808
    %v570 = vunpack.c.0.s8 %v569
    %v571 = vlaneseq
    %v572 = vshrl.u32 %v571, 7
    %v573 = vsub.s32 %v570, %v572
    %v574 = vrot.slane %v28, %v573
    %v576 = vunpack.c.l.s4 1983009808
    %v577 = vunpack.c.0.s8 %v576
    %v578 = vlaneseq
    %v579 = vshrl.u32 %v578, 7
    %v580 = vsub.s32 %v577, %v579
    %v581 = vrot.slane %v567, %v580
    %v582 = vcombine.high %v574, %v574
    %v583 = vcombine.high %v581, %v581
    %v584 = vcombine.high %v29, %v29
    %v586 = vunpack.c.l.s4 1983009808
    %v587 = vunpack.c.0.s8 %v586
    %v588 = vlaneseq
    %v589 = vshrl.u32 %v588, 7
    %v590 = vsub.s32 %v587, %v589
    %v591 = vrot.slane %v29, %v590
    %v593 = vunpack.c.l.s4 1983009808
    %v594 = vunpack.c.0.s8 %v593
    %v595 = vlaneseq
    %v596 = vshrl.u32 %v595, 7
    %v597 = vsub.s32 %v594, %v596
    %v598 = vrot.slane %v584, %v597
    %v599 = vcombine.high %v591, %v591
    %v600 = vcombine.high %v598, %v598
    %v601 = vcombine.high %v30, %v30
    %v603 = vunpack.c.l.s4 1983009808
    %v604 = vunpack.c.0.s8 %v603
    %v605 = vlaneseq
    %v606 = vshrl.u32 %v605, 7
    %v607 = vsub.s32 %v604, %v606
    %v608 = vrot.slane %v30, %v607
    %v610 = vunpack.c.l.s4 1983009808
    %v611 = vunpack.c.0.s8 %v610
    %v612 = vlaneseq
    %v613 = vshrl.u32 %v612, 7
    %v614 = vsub.s32 %v611, %v613
    %v615 = vrot.slane %v601, %v614
    %v616 = vcombine.high %v608, %v608
    %v617 = vcombine.high %v615, %v615
    %619 = vset.pattern.permute.xlu0 0
    %620 = vperm.xlu0 %619, %v563
    %v621 = vpop.permute.xlu0 %620
    %624 = vset.pattern.permute.xlu0 0
    %625 = vperm.xlu0 %624, %v564
    %v626 = vpop.permute.xlu0 %625
    %629 = vset.pattern.permute.xlu0 0
    %630 = vperm.xlu0 %629, %v565
    %v631 = vpop.permute.xlu0 %630
    %634 = vset.pattern.permute.xlu0 0
    %635 = vperm.xlu0 %634, %v566
    %v636 = vpop.permute.xlu0 %635
    %v638 = vcombine.low %v574, %v582
    %v640 = vunpack.c.l.s4 1983009808
    %v641 = vunpack.c.0.s8 %v640
    %v642 = vlaneseq
    %v643 = vshrl.u32 %v642, 7
    %v644 = vsub.s32 %v641, %v643
    %v645 = vrot.slane %v638, %v644
    %v647 = vunpack.c.l.s4 1983009808
    %v648 = vunpack.c.0.s8 %v647
    %v649 = vlaneseq
    %v650 = vshrl.u32 %v649, 7
    %v651 = vsub.s32 %v648, %v650
    %v652 = vrot.slane %v581, %v651
    %v653 = vcombine.low %v645, %v652
    %v654 = vcombine.low %v583, %v591
    %v656 = vunpack.c.l.s4 1983009808
    %v657 = vunpack.c.0.s8 %v656
    %v658 = vlaneseq
    %v659 = vshrl.u32 %v658, 7
    %v660 = vsub.s32 %v657, %v659
    %v661 = vrot.slane %v654, %v660
    %v663 = vunpack.c.l.s4 1983009808
    %v664 = vunpack.c.0.s8 %v663
    %v665 = vlaneseq
    %v666 = vshrl.u32 %v665, 7
    %v667 = vsub.s32 %v664, %v666
    %v668 = vrot.slane %v599, %v667
    %v669 = vcombine.low %v661, %v668
    %v670 = vcombine.low %v598, %v600
    %v672 = vunpack.c.l.s4 1983009808
    %v673 = vunpack.c.0.s8 %v672
    %v674 = vlaneseq
    %v675 = vshrl.u32 %v674, 7
    %v676 = vsub.s32 %v673, %v675
    %v677 = vrot.slane %v670, %v676
    %v679 = vunpack.c.l.s4 1983009808
    %v680 = vunpack.c.0.s8 %v679
    %v681 = vlaneseq
    %v682 = vshrl.u32 %v681, 7
    %v683 = vsub.s32 %v680, %v682
    %v684 = vrot.slane %v608, %v683
    %v685 = vcombine.low %v677, %v684
    %v686 = vcombine.low %v616, %v615
    %v688 = vunpack.c.l.s4 1983009808
    %v689 = vunpack.c.0.s8 %v688
    %v690 = vlaneseq
    %v691 = vshrl.u32 %v690, 7
    %v692 = vsub.s32 %v689, %v691
    %v693 = vrot.slane %v686, %v692
    %v695 = vunpack.c.l.s4 1983009808
    %v696 = vunpack.c.0.s8 %v695
    %v697 = vlaneseq
    %v698 = vshrl.u32 %v697, 7
    %v699 = vsub.s32 %v696, %v698
    %v700 = vrot.slane %v617, %v699
    %v701 = vcombine.low %v693, %v700
    %v706 = vmul.f32 %v621, %v653
    %v707 = vmul.f32 %v626, %v669
    %v708 = vmul.f32 %v631, %v685
    %v709 = vmul.f32 %v636, %v701
    %v710 = vsel %vm423, %v706, 0.0
    %v711 = vrot.slane %v710, 4
    %v712 = vadd.f32 %v710, %v711
    %v713 = vrot.slane %v712, 2
    %v714 = vadd.f32 %v712, %v713
    %v715 = vrot.slane %v714, 1
    %v716 = vadd.f32 %v714, %v715
    %v717 = vsel %vm423, %v707, 0.0
    %v718 = vrot.slane %v717, 4
    %v719 = vadd.f32 %v717, %v718
    %v720 = vrot.slane %v719, 2
    %v721 = vadd.f32 %v719, %v720
    %v722 = vrot.slane %v721, 1
    %v723 = vadd.f32 %v721, %v722
    %v724 = vsel %vm423, %v708, 0.0
    %v725 = vrot.slane %v724, 4
    %v726 = vadd.f32 %v724, %v725
    %v727 = vrot.slane %v726, 2
    %v728 = vadd.f32 %v726, %v727
    %v729 = vrot.slane %v728, 1
    %v730 = vadd.f32 %v728, %v729
    %v731 = vsel %vm423, %v709, 0.0
    %v732 = vrot.slane %v731, 4
    %v733 = vadd.f32 %v731, %v732
    %v734 = vrot.slane %v733, 2
    %v735 = vadd.f32 %v733, %v734
    %v736 = vrot.slane %v735, 1
    %v737 = vadd.f32 %v735, %v736
    %vm738 = vcmask 130048
    %v740 = vsel %vm738, %v24, 0
    %v743 = vsel %vm738, %v25, 0
    %v746 = vsel %vm738, %v26, 0
    %v749 = vsel %vm738, %v27, 0
    %751 = vmatprep.subr.mxu0 0.0
    %752 = vmatpush1.msra.mxu0 0.0
    %753 = vmatprep.subr.mxu0 0.0
    %754 = vmatpush1.msra.mxu0 0.0
    %755 = vmatprep.subr.mxu0 0.0
    %756 = vmatpush1.msra.mxu0 0.0
    %757 = vmatprep.subr.mxu0 0.0
    %758 = vmatpush1.msra.mxu0 0.0
    %759 = vmatprep.subr.mxu0 0.0
    %760 = vmatpush1.msra.mxu0 0.0
    %761 = vmatprep.subr.mxu0 0.0
    %762 = vmatpush1.msra.mxu0 0.0
    %763 = vmatprep.subr.mxu0 0.0
    %764 = vmatpush1.msra.mxu0 0.0
    %765 = vmatprep.subr.mxu0 0.0
    %766 = vmatpush1.msra.mxu0 0.0
    %767 = vmatprep.subr.mxu0 0.0
    %768 = vmatpush1.msra.mxu0 0.0
    %769 = vmatprep.subr.mxu0 0.0
    %770 = vmatpush1.msra.mxu0 0.0
    %771 = vmatprep.subr.mxu0 0.0
    %772 = vmatpush1.msra.mxu0 0.0
    %773 = vmatprep.subr.mxu0 0.0
    %774 = vmatpush1.msra.mxu0 0.0
    %775 = vmatprep.subr.mxu0 0.0
    %776 = vmatpush1.msra.mxu0 0.0
    %777 = vmatprep.subr.mxu0 0.0
    %778 = vmatpush1.msra.mxu0 0.0
    %779 = vmatprep.subr.mxu0 0.0
    %780 = vmatpush1.msra.mxu0 %v37
    %781 = vmatprep.subr.mxu0 0.0
    %782 = vmatpush1.msra.mxu0 %v36
    %783 = vmatprep.subr.mxu0 0.0
    %784 = vmatpush2.msra.mxu0 0.0
    %785 = vmatprep.subr.mxu0 0.0
    %786 = vmatpush2.msra.mxu0 0.0
    %787 = vmatprep.subr.mxu0 0.0
    %788 = vmatpush2.msra.mxu0 0.0
    %789 = vmatprep.subr.mxu0 0.0
    %790 = vmatpush2.msra.mxu0 0.0
    %791 = vmatprep.subr.mxu0 0.0
    %792 = vmatpush2.msra.mxu0 0.0
    %793 = vmatprep.subr.mxu0 0.0
    %794 = vmatpush2.msra.mxu0 0.0
    %795 = vmatprep.subr.mxu0 0.0
    %796 = vmatpush2.msra.mxu0 0.0
    %797 = vmatprep.subr.mxu0 0.0
    %798 = vmatpush2.msra.mxu0 0.0
    %799 = vmatprep.subr.mxu0 0.0
    %800 = vmatpush2.msra.mxu0 0.0
    %801 = vmatprep.subr.mxu0 0.0
    %802 = vmatpush2.msra.mxu0 0.0
    %803 = vmatprep.subr.mxu0 0.0
    %804 = vmatpush2.msra.mxu0 0.0
    %805 = vmatprep.subr.mxu0 0.0
    %806 = vmatpush2.msra.mxu0 0.0
    %807 = vmatprep.subr.mxu0 0.0
    %808 = vmatpush2.msra.mxu0 0.0
    %809 = vmatprep.subr.mxu0 0.0
    %810 = vmatpush2.msra.mxu0 0.0
    %811 = vmatprep.subr.mxu0 0.0
    %812 = vmatpush2.msra.mxu0 0.0
    %813 = vmatprep.subr.mxu0 0.0
    %814 = vmatpush2.msra.mxu0 0.0
    %815 = vmatprep.mubr.f32.mxu0 0.0
    %816 = vmatmul.mubr.f32.gmra.mxu0 %v740
    %v817 = vpop.f32.mrf.mxu0
    %v818 = vadd.f32 0.0, %v817
    %v819 = vpop.f32.mrf.mxu0
    %820 = vmatprep.mubr.f32.mxu0 0.0
    %821 = vmatmul.mubr.f32.gmra.mxu0 %v743
    %v822 = vpop.f32.mrf.mxu0
    %v823 = vadd.f32 0.0, %v822
    %v824 = vpop.f32.mrf.mxu0
    %825 = vmatprep.mubr.f32.mxu0 0.0
    %826 = vmatmul.mubr.f32.gmra.mxu0 %v746
    %v827 = vpop.f32.mrf.mxu0
    %v828 = vadd.f32 0.0, %v827
    %v829 = vpop.f32.mrf.mxu0
    %830 = vmatprep.mubr.f32.mxu0 0.0
    %831 = vmatmul.mubr.f32.gmra.mxu0 %v749
    %v832 = vpop.f32.mrf.mxu0
    %v833 = vadd.f32 0.0, %v832
    %v834 = vpop.f32.mrf.mxu0
    %835 = vdwg.mxu0
    %v840 = vsel %vm458, %v723, %v716
    %v841 = vsel %vm460, %v730, %v840
    %v842 = vsel %vm462, %v737, %v841
    %v843 = vsel %vm80, %v842, 0
    %845 = vmatprep.subr.mxu0 0.0
    %846 = vmatpush1.msra.mxu0 0.0
    %847 = vmatprep.subr.mxu0 0.0
    %848 = vmatpush1.msra.mxu0 0.0
    %849 = vmatprep.subr.mxu0 0.0
    %850 = vmatpush1.msra.mxu0 0.0
    %851 = vmatprep.subr.mxu0 0.0
    %852 = vmatpush1.msra.mxu0 0.0
    %853 = vmatprep.subr.mxu0 0.0
    %854 = vmatpush1.msra.mxu0 0.0
    %855 = vmatprep.subr.mxu0 0.0
    %856 = vmatpush1.msra.mxu0 0.0
    %857 = vmatprep.subr.mxu0 0.0
    %858 = vmatpush1.msra.mxu0 0.0
    %859 = vmatprep.subr.mxu0 0.0
    %860 = vmatpush1.msra.mxu0 0.0
    %861 = vmatprep.subr.mxu0 0.0
    %862 = vmatpush1.msra.mxu0 0.0
    %863 = vmatprep.subr.mxu0 0.0
    %864 = vmatpush1.msra.mxu0 0.0
    %865 = vmatprep.subr.mxu0 0.0
    %866 = vmatpush1.msra.mxu0 0.0
    %867 = vmatprep.subr.mxu0 0.0
    %868 = vmatpush1.msra.mxu0 0.0
    %869 = vmatprep.subr.mxu0 0.0
    %870 = vmatpush1.msra.mxu0 %v41
    %871 = vmatprep.subr.mxu0 0.0
    %872 = vmatpush1.msra.mxu0 %v40
    %873 = vmatprep.subr.mxu0 0.0
    %874 = vmatpush1.msra.mxu0 %v39
    %875 = vmatprep.subr.mxu0 0.0
    %876 = vmatpush1.msra.mxu0 %v38
    %877 = vmatprep.subr.mxu0 0.0
    %878 = vmatpush2.msra.mxu0 0.0
    %879 = vmatprep.subr.mxu0 0.0
    %880 = vmatpush2.msra.mxu0 0.0
    %881 = vmatprep.subr.mxu0 0.0
    %882 = vmatpush2.msra.mxu0 0.0
    %883 = vmatprep.subr.mxu0 0.0
    %884 = vmatpush2.msra.mxu0 0.0
    %885 = vmatprep.subr.mxu0 0.0
    %886 = vmatpush2.msra.mxu0 0.0
    %887 = vmatprep.subr.mxu0 0.0
    %888 = vmatpush2.msra.mxu0 0.0
    %889 = vmatprep.subr.mxu0 0.0
    %890 = vmatpush2.msra.mxu0 0.0
    %891 = vmatprep.subr.mxu0 0.0
    %892 = vmatpush2.msra.mxu0 0.0
    %893 = vmatprep.subr.mxu0 0.0
    %894 = vmatpush2.msra.mxu0 0.0
    %895 = vmatprep.subr.mxu0 0.0
    %896 = vmatpush2.msra.mxu0 0.0
    %897 = vmatprep.subr.mxu0 0.0
    %898 = vmatpush2.msra.mxu0 0.0
    %899 = vmatprep.subr.mxu0 0.0
    %900 = vmatpush2.msra.mxu0 0.0
    %901 = vmatprep.subr.mxu0 0.0
    %902 = vmatpush2.msra.mxu0 0.0
    %903 = vmatprep.subr.mxu0 0.0
    %904 = vmatpush2.msra.mxu0 0.0
    %905 = vmatprep.subr.mxu0 0.0
    %906 = vmatpush2.msra.mxu0 0.0
    %907 = vmatprep.subr.mxu0 0.0
    %908 = vmatpush2.msra.mxu0 0.0
    %909 = vmatprep.mubr.f32.mxu0 0.0
    %910 = vmatmul.mubr.f32.gmra.mxu0 %v843
    %v911 = vpop.f32.mrf.mxu0
    %v912 = vadd.f32 0.0, %v911
    %v913 = vpop.f32.mrf.mxu0
    %914 = vdwg.mxu0
    %v917 = vunpack.c.l.s4 1966171168
    %v918 = vunpack.c.0.s8 %v917
    %v919 = vlaneseq
    %v920 = vshrl.u32 %v919, 7
    %v921 = vsub.s32 %v918, %v920
    %v922 = vrot.slane %v912, %v921
    %v923 = vcombine.high %v922, %v922
    %v925 = vunpack.c.l.s4 1966171168
    %v926 = vunpack.c.0.s8 %v925
    %v927 = vlaneseq
    %v928 = vshrl.u32 %v927, 7
    %v929 = vsub.s32 %v926, %v928
    %v930 = vrot.slane %v922, %v929
    %v932 = vunpack.c.l.s4 1966171168
    %v933 = vunpack.c.0.s8 %v932
    %v934 = vlaneseq
    %v935 = vshrl.u32 %v934, 7
    %v936 = vsub.s32 %v933, %v935
    %v937 = vrot.slane %v923, %v936
    %v938 = vcombine.high %v930, %v930
    %v939 = vcombine.high %v937, %v937
    %v940 = vlaneseq
    %v941 = vshrl.u32 %v940, 7
    %v942 = vsub.s32 0, %v941
    %v943 = vrot.slane %v930, %v942
    %v944 = vlaneseq
    %v945 = vshrl.u32 %v944, 7
    %v946 = vsub.s32 0, %v945
    %v947 = vrot.slane %v937, %v946
    %v948 = vlaneseq
    %v949 = vshrl.u32 %v948, 7
    %v950 = vsub.s32 0, %v949
    %v951 = vrot.slane %v938, %v950
    %v952 = vlaneseq
    %v953 = vshrl.u32 %v952, 7
    %v954 = vsub.s32 0, %v953
    %v955 = vrot.slane %v939, %v954
    %v960 = vadd.f32 %v818, %v943
    %v961 = vadd.f32 %v823, %v947
    %v962 = vadd.f32 %v828, %v951
    %v963 = vadd.f32 %v833, %v955
    %v964 = vtanh.pop %v960
    %v965 = vtanh.pop %v961
    %v966 = vtanh.pop %v962
    %v967 = vtanh.pop %v963
    %v972 = vmul.f32 %v964, %v242
    %v973 = vmul.f32 %v965, %v246
    %v974 = vmul.f32 %v966, %v250
    %v975 = vmul.f32 %v967, %v254
    %v976 = vsel %vm80, %v972, 0.0
    %977 = vadd.xlane.f32.xlu0 %v976
    %v978 = vpop.xlane.xlu0 %977
    %v979 = vsel %vm80, %v973, 0.0
    %980 = vadd.xlane.f32.xlu0 %v979
    %v981 = vpop.xlane.xlu0 %980
    %v982 = vsel %vm80, %v974, 0.0
    %983 = vadd.xlane.f32.xlu0 %v982
    %v984 = vpop.xlane.xlu0 %983
    %v985 = vsel %vm80, %v975, 0.0
    %986 = vadd.xlane.f32.xlu0 %v985
    %v987 = vpop.xlane.xlu0 %986
    %v992 = vlaneseq
    %v993 = vshrl.u32 %v992, 7
    %v994 = vsub.s32 %v441, %v993
    %v995 = vrot.slane %v978, %v994
    %v996 = vlaneseq
    %v997 = vshrl.u32 %v996, 7
    %v998 = vsub.s32 %v441, %v997
    %v999 = vrot.slane %v981, %v998
    %v1000 = vlaneseq
    %v1001 = vshrl.u32 %v1000, 7
    %v1002 = vsub.s32 %v441, %v1001
    %v1003 = vrot.slane %v984, %v1002
    %v1004 = vlaneseq
    %v1005 = vshrl.u32 %v1004, 7
    %v1006 = vsub.s32 %v441, %v1005
    %v1007 = vrot.slane %v987, %v1006
    %v1008 = vsel %vm458, %v999, %v995
    %v1009 = vsel %vm460, %v1003, %v1008
    %v1010 = vsel %vm462, %v1007, %v1009
    %vm1012 = vcmask 60416
    %v1013 = vsel %vm1012, %v1010, -inf
    %1014 = vmax.xlane.f32.xlu0 %v1013
    %v1015 = vpop.xlane.xlu0 %1014
    %v1017 = vlaneseq
    %v1018 = vshrl.u32 %v1017, 7
    %v1019 = vsub.s32 0, %v1018
    %v1020 = vrot.slane %v1015, %v1019
    %v1021 = vlaneseq
    %v1022 = vshrl.u32 %v1021, 7
    %v1023 = vsub.s32 1, %v1022
    %v1024 = vrot.slane %v1015, %v1023
    %v1025 = vlaneseq
    %v1026 = vshrl.u32 %v1025, 7
    %v1027 = vsub.s32 2, %v1026
    %v1028 = vrot.slane %v1015, %v1027
    %v1029 = vlaneseq
    %v1030 = vshrl.u32 %v1029, 7
    %v1031 = vsub.s32 3, %v1030
    %v1032 = vrot.slane %v1015, %v1031
    %v1037 = vsub.f32 %v978, %v1020
    %v1038 = vsub.f32 %v981, %v1024
    %v1039 = vsub.f32 %v984, %v1028
    %v1040 = vsub.f32 %v987, %v1032
    %v1041 = vmul.f32 %v1037, 1.442695
    %v1042 = vpow.pop %v1041
    %v1043 = vmul.f32 %v1038, 1.442695
    %v1044 = vpow.pop %v1043
    %v1045 = vmul.f32 %v1039, 1.442695
    %v1046 = vpow.pop %v1045
    %v1047 = vmul.f32 %v1040, 1.442695
    %v1048 = vpow.pop %v1047
    %1053 = vset.pattern.permute.xlu0 0
    %1054 = vperm.xlu0 %1053, %v1042
    %v1055 = vpop.permute.xlu0 %1054
    %1056 = vset.pattern.permute.xlu0 0
    %1057 = vperm.xlu0 %1056, %v1044
    %v1058 = vpop.permute.xlu0 %1057
    %1059 = vset.pattern.permute.xlu0 0
    %1060 = vperm.xlu0 %1059, %v1046
    %v1061 = vpop.permute.xlu0 %1060
    %1062 = vset.pattern.permute.xlu0 0
    %1063 = vperm.xlu0 %1062, %v1048
    %v1064 = vpop.permute.xlu0 %1063
    %v1065 = vlaneseq
    %v1066 = vshrl.u32 %v1065, 7
    %v1067 = vsub.s32 %v441, %v1066
    %v1068 = vrot.slane %v1055, %v1067
    %v1069 = vlaneseq
    %v1070 = vshrl.u32 %v1069, 7
    %v1071 = vsub.s32 %v441, %v1070
    %v1072 = vrot.slane %v1058, %v1071
    %v1073 = vlaneseq
    %v1074 = vshrl.u32 %v1073, 7
    %v1075 = vsub.s32 %v441, %v1074
    %v1076 = vrot.slane %v1061, %v1075
    %v1077 = vlaneseq
    %v1078 = vshrl.u32 %v1077, 7
    %v1079 = vsub.s32 %v441, %v1078
    %v1080 = vrot.slane %v1064, %v1079
    %v1081 = vsel %vm458, %v1072, %v1068
    %v1082 = vsel %vm460, %v1076, %v1081
    %v1083 = vsel %vm462, %v1080, %v1082
    %v1085 = vsel %vm1012, %v1083, 0.0
    %1086 = vadd.xlane.f32.xlu0 %v1085
    %v1087 = vpop.xlane.xlu0 %1086
    %v1088 = vrcp.pop %v1087
    %v1090 = vlaneseq
    %v1091 = vshrl.u32 %v1090, 7
    %v1092 = vsub.s32 0, %v1091
    %v1093 = vrot.slane %v1088, %v1092
    %v1094 = vlaneseq
    %v1095 = vshrl.u32 %v1094, 7
    %v1096 = vsub.s32 1, %v1095
    %v1097 = vrot.slane %v1088, %v1096
    %v1098 = vlaneseq
    %v1099 = vshrl.u32 %v1098, 7
    %v1100 = vsub.s32 2, %v1099
    %v1101 = vrot.slane %v1088, %v1100
    %v1102 = vlaneseq
    %v1103 = vshrl.u32 %v1102, 7
    %v1104 = vsub.s32 3, %v1103
    %v1105 = vrot.slane %v1088, %v1104
    %v1110 = vmul.f32 %v1042, %v1093
    %v1111 = vmul.f32 %v1044, %v1097
    %v1112 = vmul.f32 %v1046, %v1101
    %v1113 = vmul.f32 %v1048, %v1105
    %1115 = vset.pattern.permute.xlu0 0
    %1116 = vperm.xlu0 %1115, %v1110
    %v1117 = vpop.permute.xlu0 %1116
    %1120 = vset.pattern.permute.xlu0 0
    %1121 = vperm.xlu0 %1120, %v1111
    %v1122 = vpop.permute.xlu0 %1121
    %1125 = vset.pattern.permute.xlu0 0
    %1126 = vperm.xlu0 %1125, %v1112
    %v1127 = vpop.permute.xlu0 %1126
    %1130 = vset.pattern.permute.xlu0 0
    %1131 = vperm.xlu0 %1130, %v1113
    %v1132 = vpop.permute.xlu0 %1131
    %v1134 = vmul.f32 %v1117, %v24
    %v1135 = vmul.f32 %v1122, %v25
    %v1136 = vmul.f32 %v1127, %v26
    %v1137 = vmul.f32 %v1132, %v27
    %v1138 = vsel %vm738, %v1134, 0.0
    %v1139 = vrot.slane %v1138, 4
    %v1140 = vadd.f32 %v1138, %v1139
    %v1141 = vrot.slane %v1140, 2
    %v1142 = vadd.f32 %v1140, %v1141
    %v1143 = vrot.slane %v1142, 1
    %v1144 = vadd.f32 %v1142, %v1143
    %v1145 = vsel %vm738, %v1135, 0.0
    %v1146 = vrot.slane %v1145, 4
    %v1147 = vadd.f32 %v1145, %v1146
    %v1148 = vrot.slane %v1147, 2
    %v1149 = vadd.f32 %v1147, %v1148
    %v1150 = vrot.slane %v1149, 1
    %v1151 = vadd.f32 %v1149, %v1150
    %v1152 = vsel %vm738, %v1136, 0.0
    %v1153 = vrot.slane %v1152, 4
    %v1154 = vadd.f32 %v1152, %v1153
    %v1155 = vrot.slane %v1154, 2
    %v1156 = vadd.f32 %v1154, %v1155
    %v1157 = vrot.slane %v1156, 1
    %v1158 = vadd.f32 %v1156, %v1157
    %v1159 = vsel %vm738, %v1137, 0.0
    %v1160 = vrot.slane %v1159, 4
    %v1161 = vadd.f32 %v1159, %v1160
    %v1162 = vrot.slane %v1161, 2
    %v1163 = vadd.f32 %v1161, %v1162
    %v1164 = vrot.slane %v1163, 1
    %v1165 = vadd.f32 %v1163, %v1164
    %v1166 = vlaneseq
    %v1167 = vshrl.u32 %v1166, 7
    %v1168 = vsub.s32 0, %v1167
    %v1169 = vrot.slane %v49, %v1168
    %v1174 = vsel %vm458, %v1151, %v1144
    %v1175 = vsel %vm460, %v1158, %v1174
    %v1176 = vsel %vm462, %v1165, %v1175
    %v1177 = vsel %vm738, %v1176, 0
    %1179 = vmatprep.subr.mxu0 0.0
    %1180 = vmatpush1.msra.mxu0 0.0
    %1181 = vmatprep.subr.mxu0 0.0
    %1182 = vmatpush1.msra.mxu0 0.0
    %1183 = vmatprep.subr.mxu0 0.0
    %1184 = vmatpush1.msra.mxu0 0.0
    %1185 = vmatprep.subr.mxu0 0.0
    %1186 = vmatpush1.msra.mxu0 0.0
    %1187 = vmatprep.subr.mxu0 0.0
    %1188 = vmatpush1.msra.mxu0 0.0
    %1189 = vmatprep.subr.mxu0 0.0
    %1190 = vmatpush1.msra.mxu0 0.0
    %1191 = vmatprep.subr.mxu0 0.0
    %1192 = vmatpush1.msra.mxu0 0.0
    %1193 = vmatprep.subr.mxu0 0.0
    %1194 = vmatpush1.msra.mxu0 0.0
    %1195 = vmatprep.subr.mxu0 0.0
    %1196 = vmatpush1.msra.mxu0 0.0
    %1197 = vmatprep.subr.mxu0 0.0
    %1198 = vmatpush1.msra.mxu0 0.0
    %1199 = vmatprep.subr.mxu0 0.0
    %1200 = vmatpush1.msra.mxu0 0.0
    %1201 = vmatprep.subr.mxu0 0.0
    %1202 = vmatpush1.msra.mxu0 0.0
    %1203 = vmatprep.subr.mxu0 0.0
    %1204 = vmatpush1.msra.mxu0 0.0
    %1205 = vmatprep.subr.mxu0 0.0
    %1206 = vmatpush1.msra.mxu0 0.0
    %1207 = vmatprep.subr.mxu0 0.0
    %1208 = vmatpush1.msra.mxu0 %v43
    %1209 = vmatprep.subr.mxu0 0.0
    %1210 = vmatpush1.msra.mxu0 %v42
    %1211 = vmatprep.subr.mxu0 0.0
    %1212 = vmatpush2.msra.mxu0 0.0
    %1213 = vmatprep.subr.mxu0 0.0
    %1214 = vmatpush2.msra.mxu0 0.0
    %1215 = vmatprep.subr.mxu0 0.0
    %1216 = vmatpush2.msra.mxu0 0.0
    %1217 = vmatprep.subr.mxu0 0.0
    %1218 = vmatpush2.msra.mxu0 0.0
    %1219 = vmatprep.subr.mxu0 0.0
    %1220 = vmatpush2.msra.mxu0 0.0
    %1221 = vmatprep.subr.mxu0 0.0
    %1222 = vmatpush2.msra.mxu0 0.0
    %1223 = vmatprep.subr.mxu0 0.0
    %1224 = vmatpush2.msra.mxu0 0.0
    %1225 = vmatprep.subr.mxu0 0.0
    %1226 = vmatpush2.msra.mxu0 0.0
    %1227 = vmatprep.subr.mxu0 0.0
    %1228 = vmatpush2.msra.mxu0 0.0
    %1229 = vmatprep.subr.mxu0 0.0
    %1230 = vmatpush2.msra.mxu0 0.0
    %1231 = vmatprep.subr.mxu0 0.0
    %1232 = vmatpush2.msra.mxu0 0.0
    %1233 = vmatprep.subr.mxu0 0.0
    %1234 = vmatpush2.msra.mxu0 0.0
    %1235 = vmatprep.subr.mxu0 0.0
    %1236 = vmatpush2.msra.mxu0 0.0
    %1237 = vmatprep.subr.mxu0 0.0
    %1238 = vmatpush2.msra.mxu0 0.0
    %1239 = vmatprep.subr.mxu0 0.0
    %1240 = vmatpush2.msra.mxu0 0.0
    %1241 = vmatprep.subr.mxu0 0.0
    %1242 = vmatpush2.msra.mxu0 0.0
    %1243 = vmatprep.mubr.f32.mxu0 0.0
    %1244 = vmatmul.mubr.f32.gmra.mxu0 %v1177
    %v1245 = vpop.f32.mrf.mxu0
    %v1246 = vadd.f32 %v1169, %v1245
    %v1247 = vpop.f32.mrf.mxu0
    %1248 = vdwg.mxu0
    %v1249 = vlaneseq
    %v1250 = vshrl.u32 %v1249, 7
    %v1251 = vsub.s32 0, %v1250
    %v1252 = vrot.slane %v50, %v1251
    %1253 = vmatprep.subr.mxu0 0.0
    %1254 = vmatpush1.msra.mxu0 0.0
    %1255 = vmatprep.subr.mxu0 0.0
    %1256 = vmatpush1.msra.mxu0 0.0
    %1257 = vmatprep.subr.mxu0 0.0
    %1258 = vmatpush1.msra.mxu0 0.0
    %1259 = vmatprep.subr.mxu0 0.0
    %1260 = vmatpush1.msra.mxu0 0.0
    %1261 = vmatprep.subr.mxu0 0.0
    %1262 = vmatpush1.msra.mxu0 0.0
    %1263 = vmatprep.subr.mxu0 0.0
    %1264 = vmatpush1.msra.mxu0 0.0
    %1265 = vmatprep.subr.mxu0 0.0
    %1266 = vmatpush1.msra.mxu0 0.0
    %1267 = vmatprep.subr.mxu0 0.0
    %1268 = vmatpush1.msra.mxu0 0.0
    %1269 = vmatprep.subr.mxu0 0.0
    %1270 = vmatpush1.msra.mxu0 0.0
    %1271 = vmatprep.subr.mxu0 0.0
    %1272 = vmatpush1.msra.mxu0 0.0
    %1273 = vmatprep.subr.mxu0 0.0
    %1274 = vmatpush1.msra.mxu0 0.0
    %1275 = vmatprep.subr.mxu0 0.0
    %1276 = vmatpush1.msra.mxu0 0.0
    %1277 = vmatprep.subr.mxu0 0.0
    %1278 = vmatpush1.msra.mxu0 %v47
    %1279 = vmatprep.subr.mxu0 0.0
    %1280 = vmatpush1.msra.mxu0 %v46
    %1281 = vmatprep.subr.mxu0 0.0
    %1282 = vmatpush1.msra.mxu0 %v45
    %1283 = vmatprep.subr.mxu0 0.0
    %1284 = vmatpush1.msra.mxu0 %v44
    %1285 = vmatprep.subr.mxu0 0.0
    %1286 = vmatpush2.msra.mxu0 0.0
    %1287 = vmatprep.subr.mxu0 0.0
    %1288 = vmatpush2.msra.mxu0 0.0
    %1289 = vmatprep.subr.mxu0 0.0
    %1290 = vmatpush2.msra.mxu0 0.0
    %1291 = vmatprep.subr.mxu0 0.0
    %1292 = vmatpush2.msra.mxu0 0.0
    %1293 = vmatprep.subr.mxu0 0.0
    %1294 = vmatpush2.msra.mxu0 0.0
    %1295 = vmatprep.subr.mxu0 0.0
    %1296 = vmatpush2.msra.mxu0 0.0
    %1297 = vmatprep.subr.mxu0 0.0
    %1298 = vmatpush2.msra.mxu0 0.0
    %1299 = vmatprep.subr.mxu0 0.0
    %1300 = vmatpush2.msra.mxu0 0.0
    %1301 = vmatprep.subr.mxu0 0.0
    %1302 = vmatpush2.msra.mxu0 0.0
    %1303 = vmatprep.subr.mxu0 0.0
    %1304 = vmatpush2.msra.mxu0 0.0
    %1305 = vmatprep.subr.mxu0 0.0
    %1306 = vmatpush2.msra.mxu0 0.0
    %1307 = vmatprep.subr.mxu0 0.0
    %1308 = vmatpush2.msra.mxu0 0.0
    %1309 = vmatprep.subr.mxu0 0.0
    %1310 = vmatpush2.msra.mxu0 0.0
    %1311 = vmatprep.subr.mxu0 0.0
    %1312 = vmatpush2.msra.mxu0 0.0
    %1313 = vmatprep.subr.mxu0 0.0
    %1314 = vmatpush2.msra.mxu0 0.0
    %1315 = vmatprep.subr.mxu0 0.0
    %1316 = vmatpush2.msra.mxu0 0.0
    %1317 = vmatprep.mubr.f32.mxu0 0.0
    %1318 = vmatmul.mubr.f32.gmra.mxu0 %v843
    %v1319 = vpop.f32.mrf.mxu0
    %v1320 = vadd.f32 %v1252, %v1319
    %v1321 = vpop.f32.mrf.mxu0
    %1322 = vdwg.mxu0
    %v1323 = vadd.f32 %v1246, %v1320
    %v1324 = vxor.u32 %v1323, 2147483648
    %v1325 = vmul.f32 %v1324, 1.442695
    %v1326 = vpow.pop %v1325
    %v1327 = vadd.f32 %v1326, 1.0
    %v1328 = vrcp.pop %v1327
    %v1329 = vmul.f32 1.0, %v1328
    %1331 = vrot.lane.b32.xlu0 %v1320, 64
    %v1332 = vpop.permute.xlu0 %1331
    %v1334 = vmul.f32 %v1329, %v1332
    %1336 = vrot.lane.b32.xlu0 %v1334, 64
    %v1337 = vpop.permute.xlu0 %1336
    %v1339 = vadd.f32 %v1246, %v1337
    %v1340 = vtanh.pop %v1339
    %v1341 = vsub.f32 1.0, %v1329
    %1343 = vrot.lane.b32.xlu0 %v1340, 96
    %v1344 = vpop.permute.xlu0 %1343
    %v1346 = vmul.f32 %v1341, %v1344
    %1347 = vrot.lane.b32.xlu0 %v842, 32
    %v1348 = vpop.permute.xlu0 %1347
    %v1350 = vmul.f32 %v1329, %v1348
    %v1351 = vadd.f32 %v1346, %v1350
    %1353 = vrot.lane.b32.xlu0 %v1351, 96
    %v1354 = vpop.permute.xlu0 %1353
    %v1355 = vsel %vm80, %v1354, 0
    %1357 = vmatprep.subr.mxu0 0.0
    %1358 = vmatpush1.msra.mxu0 0.0
    %1359 = vmatprep.subr.mxu0 0.0
    %1360 = vmatpush1.msra.mxu0 0.0
    %1361 = vmatprep.subr.mxu0 0.0
    %1362 = vmatpush1.msra.mxu0 0.0
    %1363 = vmatprep.subr.mxu0 0.0
    %1364 = vmatpush1.msra.mxu0 0.0
    %1365 = vmatprep.subr.mxu0 0.0
    %1366 = vmatpush1.msra.mxu0 0.0
    %1367 = vmatprep.subr.mxu0 0.0
    %1368 = vmatpush1.msra.mxu0 0.0
    %1369 = vmatprep.subr.mxu0 0.0
    %1370 = vmatpush1.msra.mxu0 0.0
    %1371 = vmatprep.subr.mxu0 0.0
    %1372 = vmatpush1.msra.mxu0 0.0
    %1373 = vmatprep.subr.mxu0 0.0
    %1374 = vmatpush1.msra.mxu0 0.0
    %1375 = vmatprep.subr.mxu0 0.0
    %1376 = vmatpush1.msra.mxu0 0.0
    %1377 = vmatprep.subr.mxu0 0.0
    %1378 = vmatpush1.msra.mxu0 0.0
    %1379 = vmatprep.subr.mxu0 0.0
    %1380 = vmatpush1.msra.mxu0 0.0
    %1381 = vmatprep.subr.mxu0 0.0
    %1382 = vmatpush1.msra.mxu0 %v41
    %1383 = vmatprep.subr.mxu0 0.0
    %1384 = vmatpush1.msra.mxu0 %v40
    %1385 = vmatprep.subr.mxu0 0.0
    %1386 = vmatpush1.msra.mxu0 %v39
    %1387 = vmatprep.subr.mxu0 0.0
    %1388 = vmatpush1.msra.mxu0 %v38
    %1389 = vmatprep.subr.mxu0 0.0
    %1390 = vmatpush2.msra.mxu0 0.0
    %1391 = vmatprep.subr.mxu0 0.0
    %1392 = vmatpush2.msra.mxu0 0.0
    %1393 = vmatprep.subr.mxu0 0.0
    %1394 = vmatpush2.msra.mxu0 0.0
    %1395 = vmatprep.subr.mxu0 0.0
    %1396 = vmatpush2.msra.mxu0 0.0
    %1397 = vmatprep.subr.mxu0 0.0
    %1398 = vmatpush2.msra.mxu0 0.0
    %1399 = vmatprep.subr.mxu0 0.0
    %1400 = vmatpush2.msra.mxu0 0.0
    %1401 = vmatprep.subr.mxu0 0.0
    %1402 = vmatpush2.msra.mxu0 0.0
    %1403 = vmatprep.subr.mxu0 0.0
    %1404 = vmatpush2.msra.mxu0 0.0
    %1405 = vmatprep.subr.mxu0 0.0
    %1406 = vmatpush2.msra.mxu0 0.0
    %1407 = vmatprep.subr.mxu0 0.0
    %1408 = vmatpush2.msra.mxu0 0.0
    %1409 = vmatprep.subr.mxu0 0.0
    %1410 = vmatpush2.msra.mxu0 0.0
    %1411 = vmatprep.subr.mxu0 0.0
    %1412 = vmatpush2.msra.mxu0 0.0
    %1413 = vmatprep.subr.mxu0 0.0
    %1414 = vmatpush2.msra.mxu0 0.0
    %1415 = vmatprep.subr.mxu0 0.0
    %1416 = vmatpush2.msra.mxu0 0.0
    %1417 = vmatprep.subr.mxu0 0.0
    %1418 = vmatpush2.msra.mxu0 0.0
    %1419 = vmatprep.subr.mxu0 0.0
    %1420 = vmatpush2.msra.mxu0 0.0
    %1421 = vmatprep.mubr.f32.mxu0 0.0
    %1422 = vmatmul.mubr.f32.gmra.mxu0 %v1355
    %v1423 = vpop.f32.mrf.mxu0
    %v1424 = vadd.f32 0.0, %v1423
    %v1425 = vpop.f32.mrf.mxu0
    %1426 = vdwg.mxu0
    %v1429 = vunpack.c.l.s4 1966171168
    %v1430 = vunpack.c.0.s8 %v1429
    %v1431 = vlaneseq
    %v1432 = vshrl.u32 %v1431, 7
    %v1433 = vsub.s32 %v1430, %v1432
    %v1434 = vrot.slane %v1424, %v1433
    %v1435 = vcombine.high %v1434, %v1434
    %v1437 = vunpack.c.l.s4 1966171168
    %v1438 = vunpack.c.0.s8 %v1437
    %v1439 = vlaneseq
    %v1440 = vshrl.u32 %v1439, 7
    %v1441 = vsub.s32 %v1438, %v1440
    %v1442 = vrot.slane %v1434, %v1441
    %v1444 = vunpack.c.l.s4 1966171168
    %v1445 = vunpack.c.0.s8 %v1444
    %v1446 = vlaneseq
    %v1447 = vshrl.u32 %v1446, 7
    %v1448 = vsub.s32 %v1445, %v1447
    %v1449 = vrot.slane %v1435, %v1448
    %v1450 = vcombine.high %v1442, %v1442
    %v1451 = vcombine.high %v1449, %v1449
    %v1452 = vlaneseq
    %v1453 = vshrl.u32 %v1452, 7
    %v1454 = vsub.s32 0, %v1453
    %v1455 = vrot.slane %v1442, %v1454
    %v1456 = vlaneseq
    %v1457 = vshrl.u32 %v1456, 7
    %v1458 = vsub.s32 0, %v1457
    %v1459 = vrot.slane %v1449, %v1458
    %v1460 = vlaneseq
    %v1461 = vshrl.u32 %v1460, 7
    %v1462 = vsub.s32 0, %v1461
    %v1463 = vrot.slane %v1450, %v1462
    %v1464 = vlaneseq
    %v1465 = vshrl.u32 %v1464, 7
    %v1466 = vsub.s32 0, %v1465
    %v1467 = vrot.slane %v1451, %v1466
    %v1472 = vadd.f32 %v818, %v1455
    %v1473 = vadd.f32 %v823, %v1459
    %v1474 = vadd.f32 %v828, %v1463
    %v1475 = vadd.f32 %v833, %v1467
    %v1476 = vtanh.pop %v1472
    %v1477 = vtanh.pop %v1473
    %v1478 = vtanh.pop %v1474
    %v1479 = vtanh.pop %v1475
    %v1480 = vmul.f32 %v1476, %v242
    %v1481 = vmul.f32 %v1477, %v246
    %v1482 = vmul.f32 %v1478, %v250
    %v1483 = vmul.f32 %v1479, %v254
    %v1484 = vsel %vm80, %v1480, 0.0
    %1485 = vadd.xlane.f32.xlu0 %v1484
    %v1486 = vpop.xlane.xlu0 %1485
    %v1487 = vsel %vm80, %v1481, 0.0
    %1488 = vadd.xlane.f32.xlu0 %v1487
    %v1489 = vpop.xlane.xlu0 %1488
    %v1490 = vsel %vm80, %v1482, 0.0
    %1491 = vadd.xlane.f32.xlu0 %v1490
    %v1492 = vpop.xlane.xlu0 %1491
    %v1493 = vsel %vm80, %v1483, 0.0
    %1494 = vadd.xlane.f32.xlu0 %v1493
    %v1495 = vpop.xlane.xlu0 %1494
    %v1500 = vlaneseq
    %v1501 = vshrl.u32 %v1500, 7
    %v1502 = vsub.s32 %v441, %v1501
    %v1503 = vrot.slane %v1486, %v1502
    %v1504 = vlaneseq
    %v1505 = vshrl.u32 %v1504, 7
    %v1506 = vsub.s32 %v441, %v1505
    %v1507 = vrot.slane %v1489, %v1506
    %v1508 = vlaneseq
    %v1509 = vshrl.u32 %v1508, 7
    %v1510 = vsub.s32 %v441, %v1509
    %v1511 = vrot.slane %v1492, %v1510
    %v1512 = vlaneseq
    %v1513 = vshrl.u32 %v1512, 7
    %v1514 = vsub.s32 %v441, %v1513
    %v1515 = vrot.slane %v1495, %v1514
    %v1516 = vsel %vm458, %v1507, %v1503
    %v1517 = vsel %vm460, %v1511, %v1516
    %v1518 = vsel %vm462, %v1515, %v1517
    %v1520 = vsel %vm1012, %v1518, -inf
    %1521 = vmax.xlane.f32.xlu0 %v1520
    %v1522 = vpop.xlane.xlu0 %1521
    %v1524 = vlaneseq
    %v1525 = vshrl.u32 %v1524, 7
    %v1526 = vsub.s32 0, %v1525
    %v1527 = vrot.slane %v1522, %v1526
    %v1528 = vlaneseq
    %v1529 = vshrl.u32 %v1528, 7
    %v1530 = vsub.s32 1, %v1529
    %v1531 = vrot.slane %v1522, %v1530
    %v1532 = vlaneseq
    %v1533 = vshrl.u32 %v1532, 7
    %v1534 = vsub.s32 2, %v1533
    %v1535 = vrot.slane %v1522, %v1534
    %v1536 = vlaneseq
    %v1537 = vshrl.u32 %v1536, 7
    %v1538 = vsub.s32 3, %v1537
    %v1539 = vrot.slane %v1522, %v1538
    %v1544 = vsub.f32 %v1486, %v1527
    %v1545 = vsub.f32 %v1489, %v1531
    %v1546 = vsub.f32 %v1492, %v1535
    %v1547 = vsub.f32 %v1495, %v1539
    %v1548 = vmul.f32 %v1544, 1.442695
    %v1549 = vpow.pop %v1548
    %v1550 = vmul.f32 %v1545, 1.442695
    %v1551 = vpow.pop %v1550
    %v1552 = vmul.f32 %v1546, 1.442695
    %v1553 = vpow.pop %v1552
    %v1554 = vmul.f32 %v1547, 1.442695
    %v1555 = vpow.pop %v1554
    %1560 = vset.pattern.permute.xlu0 0
    %1561 = vperm.xlu0 %1560, %v1549
    %v1562 = vpop.permute.xlu0 %1561
    %1563 = vset.pattern.permute.xlu0 0
    %1564 = vperm.xlu0 %1563, %v1551
    %v1565 = vpop.permute.xlu0 %1564
    %1566 = vset.pattern.permute.xlu0 0
    %1567 = vperm.xlu0 %1566, %v1553
    %v1568 = vpop.permute.xlu0 %1567
    %1569 = vset.pattern.permute.xlu0 0
    %1570 = vperm.xlu0 %1569, %v1555
    %v1571 = vpop.permute.xlu0 %1570
    %v1572 = vlaneseq
    %v1573 = vshrl.u32 %v1572, 7
    %v1574 = vsub.s32 %v441, %v1573
    %v1575 = vrot.slane %v1562, %v1574
    %v1576 = vlaneseq
    %v1577 = vshrl.u32 %v1576, 7
    %v1578 = vsub.s32 %v441, %v1577
    %v1579 = vrot.slane %v1565, %v1578
    %v1580 = vlaneseq
    %v1581 = vshrl.u32 %v1580, 7
    %v1582 = vsub.s32 %v441, %v1581
    %v1583 = vrot.slane %v1568, %v1582
    %v1584 = vlaneseq
    %v1585 = vshrl.u32 %v1584, 7
    %v1586 = vsub.s32 %v441, %v1585
    %v1587 = vrot.slane %v1571, %v1586
    %v1588 = vsel %vm458, %v1579, %v1575
    %v1589 = vsel %vm460, %v1583, %v1588
    %v1590 = vsel %vm462, %v1587, %v1589
    %v1592 = vsel %vm1012, %v1590, 0.0
    %1593 = vadd.xlane.f32.xlu0 %v1592
    %v1594 = vpop.xlane.xlu0 %1593
    %v1595 = vrcp.pop %v1594
    %v1597 = vlaneseq
    %v1598 = vshrl.u32 %v1597, 7
    %v1599 = vsub.s32 0, %v1598
    %v1600 = vrot.slane %v1595, %v1599
    %v1601 = vlaneseq
    %v1602 = vshrl.u32 %v1601, 7
    %v1603 = vsub.s32 1, %v1602
    %v1604 = vrot.slane %v1595, %v1603
    %v1605 = vlaneseq
    %v1606 = vshrl.u32 %v1605, 7
    %v1607 = vsub.s32 2, %v1606
    %v1608 = vrot.slane %v1595, %v1607
    %v1609 = vlaneseq
    %v1610 = vshrl.u32 %v1609, 7
    %v1611 = vsub.s32 3, %v1610
    %v1612 = vrot.slane %v1595, %v1611
    %v1617 = vmul.f32 %v1549, %v1600
    %v1618 = vmul.f32 %v1551, %v1604
    %v1619 = vmul.f32 %v1553, %v1608
    %v1620 = vmul.f32 %v1555, %v1612
    %v1621 = vlaneseq
    %v1622 = vshrl.u32 %v1621, 7
    %v1623 = vsub.s32 %v441, %v1622
    %v1624 = vrot.slane %v1117, %v1623
    %v1625 = vlaneseq
    %v1626 = vshrl.u32 %v1625, 7
    %v1627 = vsub.s32 %v441, %v1626
    %v1628 = vrot.slane %v1122, %v1627
    %v1629 = vlaneseq
    %v1630 = vshrl.u32 %v1629, 7
    %v1631 = vsub.s32 %v441, %v1630
    %v1632 = vrot.slane %v1127, %v1631
    %v1633 = vlaneseq
    %v1634 = vshrl.u32 %v1633, 7
    %v1635 = vsub.s32 %v441, %v1634
    %v1636 = vrot.slane %v1132, %v1635
    %v1637 = vsel %vm458, %v1628, %v1624
    %v1638 = vsel %vm460, %v1632, %v1637
    %v1639 = vsel %vm462, %v1636, %v1638
    %1645 = vset.pattern.permute.xlu0 0
    %1646 = vperm.xlu0 %1645, %v1617
    %v1647 = vpop.permute.xlu0 %1646
    %1648 = vset.pattern.permute.xlu0 0
    %1649 = vperm.xlu0 %1648, %v1618
    %v1650 = vpop.permute.xlu0 %1649
    %1651 = vset.pattern.permute.xlu0 0
    %1652 = vperm.xlu0 %1651, %v1619
    %v1653 = vpop.permute.xlu0 %1652
    %1654 = vset.pattern.permute.xlu0 0
    %1655 = vperm.xlu0 %1654, %v1620
    %v1656 = vpop.permute.xlu0 %1655
    %v1657 = vadd.s32 %v441, 4294967288
    %v1658 = vlaneseq
    %v1659 = vshrl.u32 %v1658, 7
    %v1660 = vsub.s32 %v1657, %v1659
    %v1661 = vrot.slane %v1647, %v1660
    %v1662 = vlaneseq
    %v1663 = vshrl.u32 %v1662, 7
    %v1664 = vsub.s32 %v1657, %v1663
    %v1665 = vrot.slane %v1650, %v1664
    %v1666 = vlaneseq
    %v1667 = vshrl.u32 %v1666, 7
    %v1668 = vsub.s32 %v1657, %v1667
    %v1669 = vrot.slane %v1653, %v1668
    %v1670 = vlaneseq
    %v1671 = vshrl.u32 %v1670, 7
    %v1672 = vsub.s32 %v1657, %v1671
    %v1673 = vrot.slane %v1656, %v1672
    %v1674 = vsel %vm458, %v1665, %v1661
    %v1675 = vsel %vm460, %v1669, %v1674
    %v1676 = vsel %vm462, %v1673, %v1675
    %vm1678 = vcmask 64512
    %v1679 = vsel %vm1678, %v1639, %v1676
    %vm1680 = vcmask 125952
    %1681 = vst.msk [vmem:[#allocation2] sm:$0xf] %vm1680, %v1679
    // Predicated region
    $region26: #{tpu_custom_call.1} parent=1 // pred_check
      _
    $region27: #{tpu_custom_call.1} parent=1 // pred_check_branch
      %1683 = sbr.rel (0) target = $region29
    $region28: #{tpu_custom_call.1} parent=1 // pred_region
      %s1685 = ssub.s32 64, 64
      %1686 = vsyncadd [#allocation3], %s1685
      %s1688 = sshll.u32 [#allocation2], 4
      %s1689 = int_to_ptr.vmem [resolvable:$true] %s1688
      %1691 = dma.vmem_to_hbm [thread:$0]  %s1689, 64, %s6, [#allocation3]
    $region29: #{tpu_custom_call.1} parent=1 // pred_fallthru
      _
    // Predicated region
    $region30: #{tpu_custom_call.1} parent=1 // pred_check
      _
    $region31: #{tpu_custom_call.1} parent=1 // pred_check_branch
      %1693 = sbr.rel (0) target = $region33
    $region32: #{tpu_custom_call.1} parent=1 // pred_region
      %1694 = dma.done [#allocation3], 64
    $region33: #{tpu_custom_call.1} parent=1 // pred_fallthru
      _
    %1695 = vsyncpa [#allocation3], 1

</llo_original>
